<compile_context>
chip_gen: v5e
topology: v5e:2x2
jax: 0.10.0
libtpu: 0.0.40
codegen_flags: <defaults>
</compile_context>

<pallas_src>
import functools

import jax
import jax.numpy as jnp
from jax import lax
from jax.experimental import pallas as pl
from jax.experimental.pallas import tpu as pltpu


def _round_up(v, m):
    return (v + m - 1) // m * m


def _make_wfun(smoothness):
    if smoothness == 1:
        return lambda w: w
    if smoothness == 2:
        return lambda w: (3.0 - 2.0 * w) * w * w
    return lambda w: (10.0 + w * (6.0 * w - 15.0)) * w * w * w


def _fmod_frac_idx(x_scaled, res):
    """torch.fmod(x*res, res), torch.frac, floor index.  Shared by kernel and
    reference so both see identical lattice coordinates (division replaced by a
    multiply with the static reciprocal; differs from fmod only at measure-zero
    quotient boundaries)."""
    res_f = float(res)
    xm = x_scaled - jnp.trunc(x_scaled * (1.0 / res_f)) * res_f
    locs = xm - jnp.trunc(xm)
    idx_a = jnp.floor(xm).astype(jnp.int32)
    return xm, locs, idx_a


# ----------------------------- Pallas kernel -----------------------------

def _composite_perlin_kernel(xT_ref, *refs, res_list, f_pad, smoothness,
                             periodic):
    g_refs = refs[:-1]
    out_ref = refs[-1]
    fp = f_pad
    wfun = _make_wfun(smoothness)

    xT = xT_ref[...]                              # (2, tn) f32, points on lanes
    tn = xT.shape[1]

    # One iota for the largest table; per-component row slices are 128-aligned
    # and therefore free.
    max_r2 = max(g.shape[1] for g in g_refs)
    iota = lax.broadcasted_iota(jnp.int32, (max_r2, 4 * tn), 0)

    acc = jnp.zeros((fp, tn), jnp.float32)

    # Static (trace-time) unroll over components: res is a Python constant per
    # iteration, each component uses its own padded flat-cell count.
    for g_ref, res in zip(g_refs, res_list):
        res_f = float(res)
        r1 = res + 1
        r2 = g_ref.shape[1]                       # this component's padded cells

        _, locs, idx_a = _fmod_frac_idx(xT * res_f, res)   # (2, tn)
        idx_b = idx_a + 1
        if periodic:
            idx_b = jnp.where(idx_b == res, 0, idx_b)
        idx_b = jnp.minimum(idx_b, res)           # robustness clamp (no-op in range)
        # TODO(synk): torch wraps negative gather indices (python negative
        # indexing); the one-hot lookup below yields zero grads for x < 0.

        ix_a, iy_a = idx_a[0:1, :], idx_a[1:2, :]
        ix_b, iy_b = idx_b[0:1, :], idx_b[1:2, :]
        # 4 corners fused on the lane axis, chunk order (00, 01, 10, 11).
        flat = jnp.concatenate(
            [ix_a * r1 + iy_a, ix_a * r1 + iy_b,
             ix_b * r1 + iy_a, ix_b * r1 + iy_b], axis=1)            # (1, 4*tn)

        onehot = (iota[:r2, :] == flat).astype(jnp.bfloat16)          # (r2, 4*tn)

        # g_ref rows: [hi_d0 | hi_d1 | mid_d0 | mid_d1 | lo_d0 | lo_d1], each
        # block f_pad rows.  Single bf16 MXU pass (one weight push per output
        # tile); summing the three split terms recovers the f32 table exactly.
        gc3 = jnp.dot(g_ref[...], onehot,
                      preferred_element_type=jnp.float32)             # (6fp, 4tn)
        gc = gc3[0:2 * fp, :] + gc3[2 * fp:4 * fp, :] + gc3[4 * fp:6 * fp, :]

        lx, ly = locs[0:1, :], locs[1:2, :]

        def corner(k, offx, offy):
            g = gc[:, k * tn:(k + 1) * tn]                            # (2fp, tn)
            return g[0:fp, :] * offx + g[fp:2 * fp, :] * offy         # (fp, tn)

        v00 = corner(0, lx, ly)
        v01 = corner(1, lx, ly - 1.0)
        v10 = corner(2, lx - 1.0, ly)
        v11 = corner(3, lx - 1.0, ly - 1.0)

        wx = wfun(lx)
        wy = wfun(ly)
        u0 = v00 + wx * (v10 - v00)               # lerp over corner axis 0 (x)
        u1 = v01 + wx * (v11 - v01)
        acc = acc + (u0 + wy * (u1 - u0))         # lerp over corner axis 1 (y)

    out_ref[...] = acc


def composite_perlin(x, g_tables, res_list, *, n_fields, smoothness=1,
                     periodic=False, tile_n=512):
    n, d = x.shape
    assert d == 2, "kernel is specialized to n_dims=2"
    f_pad = _round_up(n_fields, 8)
    for g in g_tables:
        assert g.shape[0] == 6 * f_pad

    # Pad N to a multiple of 128 only (not of the tile) to avoid wasted work.
    n_pad = _round_up(max(n, 128), 128)
    max_r2 = max(g.shape[1] for g in g_tables)

    # Dominant per-tile temporaries: bf16 onehot (max_r2 x 4*tn) and the f32
    # matmul output (6*f_pad x 4*tn).  Budget them so the default scoped-VMEM
    # limits (v5e 16 MiB / v6e 32 MiB / v7x 32 MiB) keep a 2-deep pipeline
    # without raising vmem_limit_bytes.
    budget_bytes = 8 * 1024 * 1024
    bytes_per_point = 4 * (2 * max_r2 + 4 * 6 * f_pad) + 64
    tn = max(128, budget_bytes // bytes_per_point // 128 * 128)
    tn = min(tn, tile_n, n_pad)
    if n_pad >= 256:
        # >= 2 N-tiles so "parallel" can shard across v7x's two TensorCores.
        tn = min(tn, n_pad // 2 // 128 * 128)
    while n_pad % tn != 0:                        # 128 always divides n_pad
        tn -= 128

    xT = jnp.pad(x, ((0, n_pad - n), (0, 0))).T   # (2, n_pad), points on lanes

    kernel = functools.partial(
        _composite_perlin_kernel,
        res_list=tuple(int(r) for r in res_list),
        f_pad=f_pad, smoothness=smoothness, periodic=periodic)

    in_specs = [pl.BlockSpec((2, tn), lambda ni: (0, ni))]
    for g in g_tables:
        # Full-table block with a constant index map: DMA'd once, stays
        # resident in VMEM across N-tiles.
        in_specs.append(pl.BlockSpec(g.shape, lambda ni: (0, 0)))

    out_t = pl.pallas_call(
        kernel,
        out_shape=jax.ShapeDtypeStruct((f_pad, n_pad), jnp.float32),
        grid=(n_pad // tn,),
        in_specs=in_specs,
        out_specs=pl.BlockSpec((f_pad, tn), lambda ni: (0, ni)),
        compiler_params=pltpu.CompilerParams(
            dimension_semantics=("parallel",)),
    )(xT, *g_tables)
    return out_t.T[:n, :n_fields]                 # back to (N, F)


# ---------------- parameter init + packing (plain-JAX glue) ----------------

def init_grads(key, n_dims, n_fields, res_list):
    """Deterministic stand-in for PerlinNoise.init_grads (normal, L2-normalized
    along the dims axis)."""
    grads = []
    for i, res in enumerate(res_list):
        k = jax.random.fold_in(key, i)
        shape = (res + 1,) * n_dims + (n_fields, n_dims)
        g = jax.random.normal(k, shape, dtype=jnp.float32)
        g = g / jnp.maximum(jnp.linalg.norm(g, axis=-1, keepdims=True), 1e-12)
        grads.append(g)
    return grads


def pack_grads(grads_list, res_list, n_fields, n_dims, multiplier):
    """Per-component packed tables (one per resolution).

    Each table is (6*F_pad, r2pad_i) bf16 with r2pad_i = round_up((res+1)^2,
    128) sized PER COMPONENT; rows = [hi_d0 | hi_d1 | mid_d0 | mid_d1 | lo_d0 |
    lo_d1] (each block F_pad = round_up(F, 8) rows), column = ix*(res+1) + iy.
    The per-component multiplier is folded in before the 3-term bf16 split,
    whose in-kernel sum recovers the f32 table to <= 2^-24 relative error."""
    assert n_dims == 2
    f_pad = _round_up(n_fields, 8)
    tables = []
    for g, res in zip(grads_list, res_list):
        mult = multiplier * float(res_list[0]) / float(res)
        r1 = res + 1
        r2pad = _round_up(r1 * r1, 128)
        gt = jnp.transpose(g, (3, 2, 0, 1))                      # (D, F, r1, r1)
        gt = jnp.pad(gt, ((0, 0), (0, f_pad - n_fields), (0, 0), (0, 0)))
        gt = gt.reshape(n_dims * f_pad, r1 * r1) * mult          # (2Fp, r1*r1)
        gt = jnp.pad(gt, ((0, 0), (0, r2pad - r1 * r1)))         # (2Fp, r2pad)
        hi = gt.astype(jnp.bfloat16)
        rem = gt - hi.astype(jnp.float32)
        mid = rem.astype(jnp.bfloat16)
        lo = (rem - mid.astype(jnp.float32)).astype(jnp.bfloat16)
        tables.append(jnp.concatenate([hi, mid, lo], axis=0))    # (6Fp, r2pad)
    return tables


# ------------- pure-JAX reference (mirrors PyTorch semantics) -------------

def perlin_ref(x, g, res, multiplier, smoothness, periodic):
    wfun = _make_wfun(smoothness)
    _, locs, idx_a = _fmod_frac_idx(x * float(res), res)
    idx_b = idx_a + 1
    if periodic:
        idx_b = jnp.where(idx_b == res, 0, idx_b)

    def cv(c0, c1):
        ix = (idx_b if c0 else idx_a)[:, 0]
        iy = (idx_b if c1 else idx_a)[:, 1]
        gv = g[ix, iy]                                           # (N, F, D)
        off = jnp.stack([locs[:, 0] - c0, locs[:, 1] - c1], axis=-1)
        return jnp.sum(gv * off[:, None, :], axis=-1)

    v00, v01, v10, v11 = cv(0, 0), cv(0, 1), cv(1, 0), cv(1, 1)
    wx = wfun(locs[:, 0:1])
    wy = wfun(locs[:, 1:2])
    u0 = v00 + wx * (v10 - v00)
    u1 = v01 + wx * (v11 - v01)
    return (u0 + wy * (u1 - u0)) * multiplier


if __name__ == "__main__":
    n_dims, n_fields = 2, 4
    res_list = [4, 8]
    smoothness = 2
    periodic = False
    multiplier = 1.0
    N = 256

    key = jax.random.PRNGKey(0)
    kx, kg = jax.random.split(key)
    # Points in [0, 1)^2, matching the typical Perlin query range.
    x = jax.random.uniform(kx, (N, n_dims), dtype=jnp.float32)

    grads_list = init_grads(kg, n_dims, n_fields, res_list)
    g_tables = pack_grads(grads_list, res_list, n_fields, n_dims, multiplier)

    out = composite_perlin(x, g_tables, res_list, n_fields=n_fields,
                           smoothness=smoothness, periodic=periodic)
    out = jax.block_until_ready(out)

    ref = jnp.zeros((N, n_fields), jnp.float32)
    for g, res in zip(grads_list, res_list):
        mult = multiplier * float(res_list[0]) / float(res)
        ref = ref + perlin_ref(x, g, res, mult, smoothness, periodic)

    assert out.shape == (N, n_fields)
    max_err = float(jnp.max(jnp.abs(out - ref)))
    assert jnp.allclose(out, ref, atol=1e-5, rtol=1e-5), max_err
    print("KERNEL_OK")
</pallas_src>

<mosaic_0001>
module attributes {stable_mosaic.version = 11 : i64} {
  func.func @_composite_perlin_kernel(%arg0: i32, %arg1: memref<2x128xf32, #tpu.memory_space<vmem>>, %arg2: memref<48x128xbf16, #tpu.memory_space<vmem>>, %arg3: memref<48x128xbf16, #tpu.memory_space<vmem>>, %arg4: memref<8x128xf32, #tpu.memory_space<vmem>>) attributes {dimension_semantics = [#tpu.dimension_semantics<parallel>], iteration_bounds = array<i64: 2>, scalar_prefetch = 0 : i64, scratch_operands = 0 : i64, tpu.core_type = #tpu.core_type<tc>, window_params = [{transform_indices = @transform_0, window_bounds = array<i64: 2, 128>}, {pipeline_mode = #tpu.pipeline_mode<synchronous>, transform_indices = @transform_1, window_bounds = array<i64: 48, 128>}, {pipeline_mode = #tpu.pipeline_mode<synchronous>, transform_indices = @transform_2, window_bounds = array<i64: 48, 128>}, {transform_indices = @transform_3, window_bounds = array<i64: 8, 128>}]} {
    %c0 = arith.constant 0 : index
    %c0_0 = arith.constant 0 : index
    %0 = vector.load %arg1[%c0, %c0_0] : memref<2x128xf32, #tpu.memory_space<vmem>>, vector<2x128xf32>
    %1 = tpu.iota {dimensions = array<i32: 0>} : vector<128x512xi32>
    %cst = arith.constant 0.000000e+00 : f32
    %2 = vector.broadcast %cst : f32 to vector<8x128xf32>
    %cst_1 = arith.constant 4.000000e+00 : f32
    %3 = vector.broadcast %cst_1 : f32 to vector<2x128xf32>
    %4 = arith.mulf %0, %3 : vector<2x128xf32>
    %cst_2 = arith.constant 2.500000e-01 : f32
    %5 = vector.broadcast %cst_2 : f32 to vector<2x128xf32>
    %6 = arith.mulf %4, %5 : vector<2x128xf32>
    %cst_3 = arith.constant 0.000000e+00 : f32
    %7 = vector.broadcast %cst_3 : f32 to vector<2x128xf32>
    %8 = arith.cmpf olt, %6, %7 : vector<2x128xf32>
    %9 = math.ceil %6 : vector<2x128xf32>
    %10 = math.floor %6 : vector<2x128xf32>
    %11 = arith.select %8, %9, %10 : vector<2x128xi1>, vector<2x128xf32>
    %cst_4 = arith.constant 4.000000e+00 : f32
    %12 = vector.broadcast %cst_4 : f32 to vector<2x128xf32>
    %13 = arith.mulf %11, %12 : vector<2x128xf32>
    %14 = arith.subf %4, %13 : vector<2x128xf32>
    %cst_5 = arith.constant 0.000000e+00 : f32
    %15 = vector.broadcast %cst_5 : f32 to vector<2x128xf32>
    %16 = arith.cmpf olt, %14, %15 : vector<2x128xf32>
    %17 = math.ceil %14 : vector<2x128xf32>
    %18 = math.floor %14 : vector<2x128xf32>
    %19 = arith.select %16, %17, %18 : vector<2x128xi1>, vector<2x128xf32>
    %20 = arith.subf %14, %19 : vector<2x128xf32>
    %21 = math.floor %14 : vector<2x128xf32>
    %22 = arith.fptosi %21 : vector<2x128xf32> to vector<2x128xi32>
    %c1_i32 = arith.constant 1 : i32
    %23 = vector.broadcast %c1_i32 : i32 to vector<2x128xi32>
    %24 = arith.addi %22, %23 : vector<2x128xi32>
    %c4_i32 = arith.constant 4 : i32
    %25 = vector.broadcast %c4_i32 : i32 to vector<2x128xi32>
    %26 = arith.minsi %24, %25 : vector<2x128xi32>
    %27 = vector.extract_strided_slice %22 {offsets = [0, 0], sizes = [1, 128], strides = [1, 1]} : vector<2x128xi32> to vector<1x128xi32>
    %28 = vector.extract_strided_slice %22 {offsets = [1, 0], sizes = [1, 128], strides = [1, 1]} : vector<2x128xi32> to vector<1x128xi32>
    %29 = vector.extract_strided_slice %26 {offsets = [0, 0], sizes = [1, 128], strides = [1, 1]} : vector<2x128xi32> to vector<1x128xi32>
    %30 = vector.extract_strided_slice %26 {offsets = [1, 0], sizes = [1, 128], strides = [1, 1]} : vector<2x128xi32> to vector<1x128xi32>
    %c5_i32 = arith.constant 5 : i32
    %31 = vector.broadcast %c5_i32 : i32 to vector<1x128xi32>
    %32 = arith.muli %27, %31 : vector<1x128xi32>
    %33 = arith.addi %32, %28 : vector<1x128xi32>
    %c5_i32_6 = arith.constant 5 : i32
    %34 = vector.broadcast %c5_i32_6 : i32 to vector<1x128xi32>
    %35 = arith.muli %27, %34 : vector<1x128xi32>
    %36 = arith.addi %35, %30 : vector<1x128xi32>
    %c5_i32_7 = arith.constant 5 : i32
    %37 = vector.broadcast %c5_i32_7 : i32 to vector<1x128xi32>
    %38 = arith.muli %29, %37 : vector<1x128xi32>
    %39 = arith.addi %38, %28 : vector<1x128xi32>
    %c5_i32_8 = arith.constant 5 : i32
    %40 = vector.broadcast %c5_i32_8 : i32 to vector<1x128xi32>
    %41 = arith.muli %29, %40 : vector<1x128xi32>
    %42 = arith.addi %41, %30 : vector<1x128xi32>
    %43 = tpu.concatenate %33, %36, %39, %42 in 1 : vector<1x128xi32>, vector<1x128xi32>, vector<1x128xi32>, vector<1x128xi32> -> vector<1x512xi32>
    %44 = vector.broadcast %43 : vector<1x512xi32> to vector<128x512xi32>
    %45 = arith.cmpi eq, %1, %44 : vector<128x512xi32>
    %46 = arith.extui %45 : vector<128x512xi1> to vector<128x512xi32>
    %47 = arith.sitofp %46 : vector<128x512xi32> to vector<128x512xf32>
    %48 = arith.truncf %47 : vector<128x512xf32> to vector<128x512xbf16>
    %c0_9 = arith.constant 0 : index
    %c0_10 = arith.constant 0 : index
    %49 = vector.load %arg2[%c0_9, %c0_10] : memref<48x128xbf16, #tpu.memory_space<vmem>>, vector<48x128xbf16>
    %cst_11 = arith.constant dense<0.000000e+00> : vector<48x512xf32>
    %50 = tpu.matmul %49, %48, %cst_11 {dimension_numbers = #tpu.dot_dimension_numbers<[1], [0], [0], [1], [0, 0, 1, 1], [], []>} : vector<48x128xbf16>, vector<128x512xbf16>, vector<48x512xf32> -> vector<48x512xf32>
    %51 = vector.extract_strided_slice %50 {offsets = [0, 0], sizes = [16, 512], strides = [1, 1]} : vector<48x512xf32> to vector<16x512xf32>
    %52 = vector.extract_strided_slice %50 {offsets = [16, 0], sizes = [16, 512], strides = [1, 1]} : vector<48x512xf32> to vector<16x512xf32>
    %53 = arith.addf %51, %52 : vector<16x512xf32>
    %54 = vector.extract_strided_slice %50 {offsets = [32, 0], sizes = [16, 512], strides = [1, 1]} : vector<48x512xf32> to vector<16x512xf32>
    %55 = arith.addf %53, %54 : vector<16x512xf32>
    %56 = vector.extract_strided_slice %20 {offsets = [0, 0], sizes = [1, 128], strides = [1, 1]} : vector<2x128xf32> to vector<1x128xf32>
    %57 = vector.extract_strided_slice %20 {offsets = [1, 0], sizes = [1, 128], strides = [1, 1]} : vector<2x128xf32> to vector<1x128xf32>
    %58 = vector.extract_strided_slice %55 {offsets = [0, 0], sizes = [16, 128], strides = [1, 1]} : vector<16x512xf32> to vector<16x128xf32>
    %59 = vector.extract_strided_slice %58 {offsets = [0, 0], sizes = [8, 128], strides = [1, 1]} : vector<16x128xf32> to vector<8x128xf32>
    %60 = vector.broadcast %56 : vector<1x128xf32> to vector<8x128xf32>
    %61 = arith.mulf %59, %60 : vector<8x128xf32>
    %62 = vector.extract_strided_slice %58 {offsets = [8, 0], sizes = [8, 128], strides = [1, 1]} : vector<16x128xf32> to vector<8x128xf32>
    %63 = vector.broadcast %57 : vector<1x128xf32> to vector<8x128xf32>
    %64 = arith.mulf %62, %63 : vector<8x128xf32>
    %65 = arith.addf %61, %64 : vector<8x128xf32>
    %cst_12 = arith.constant 1.000000e+00 : f32
    %66 = vector.broadcast %cst_12 : f32 to vector<1x128xf32>
    %67 = arith.subf %57, %66 : vector<1x128xf32>
    %68 = vector.extract_strided_slice %55 {offsets = [0, 128], sizes = [16, 128], strides = [1, 1]} : vector<16x512xf32> to vector<16x128xf32>
    %69 = vector.extract_strided_slice %68 {offsets = [0, 0], sizes = [8, 128], strides = [1, 1]} : vector<16x128xf32> to vector<8x128xf32>
    %70 = vector.broadcast %56 : vector<1x128xf32> to vector<8x128xf32>
    %71 = arith.mulf %69, %70 : vector<8x128xf32>
    %72 = vector.extract_strided_slice %68 {offsets = [8, 0], sizes = [8, 128], strides = [1, 1]} : vector<16x128xf32> to vector<8x128xf32>
    %73 = vector.broadcast %67 : vector<1x128xf32> to vector<8x128xf32>
    %74 = arith.mulf %72, %73 : vector<8x128xf32>
    %75 = arith.addf %71, %74 : vector<8x128xf32>
    %cst_13 = arith.constant 1.000000e+00 : f32
    %76 = vector.broadcast %cst_13 : f32 to vector<1x128xf32>
    %77 = arith.subf %56, %76 : vector<1x128xf32>
    %78 = vector.extract_strided_slice %55 {offsets = [0, 256], sizes = [16, 128], strides = [1, 1]} : vector<16x512xf32> to vector<16x128xf32>
    %79 = vector.extract_strided_slice %78 {offsets = [0, 0], sizes = [8, 128], strides = [1, 1]} : vector<16x128xf32> to vector<8x128xf32>
    %80 = vector.broadcast %77 : vector<1x128xf32> to vector<8x128xf32>
    %81 = arith.mulf %79, %80 : vector<8x128xf32>
    %82 = vector.extract_strided_slice %78 {offsets = [8, 0], sizes = [8, 128], strides = [1, 1]} : vector<16x128xf32> to vector<8x128xf32>
    %83 = vector.broadcast %57 : vector<1x128xf32> to vector<8x128xf32>
    %84 = arith.mulf %82, %83 : vector<8x128xf32>
    %85 = arith.addf %81, %84 : vector<8x128xf32>
    %cst_14 = arith.constant 1.000000e+00 : f32
    %86 = vector.broadcast %cst_14 : f32 to vector<1x128xf32>
    %87 = arith.subf %56, %86 : vector<1x128xf32>
    %cst_15 = arith.constant 1.000000e+00 : f32
    %88 = vector.broadcast %cst_15 : f32 to vector<1x128xf32>
    %89 = arith.subf %57, %88 : vector<1x128xf32>
    %90 = vector.extract_strided_slice %55 {offsets = [0, 384], sizes = [16, 128], strides = [1, 1]} : vector<16x512xf32> to vector<16x128xf32>
    %91 = vector.extract_strided_slice %90 {offsets = [0, 0], sizes = [8, 128], strides = [1, 1]} : vector<16x128xf32> to vector<8x128xf32>
    %92 = vector.broadcast %87 : vector<1x128xf32> to vector<8x128xf32>
    %93 = arith.mulf %91, %92 : vector<8x128xf32>
    %94 = vector.extract_strided_slice %90 {offsets = [8, 0], sizes = [8, 128], strides = [1, 1]} : vector<16x128xf32> to vector<8x128xf32>
    %95 = vector.broadcast %89 : vector<1x128xf32> to vector<8x128xf32>
    %96 = arith.mulf %94, %95 : vector<8x128xf32>
    %97 = arith.addf %93, %96 : vector<8x128xf32>
    %cst_16 = arith.constant 2.000000e+00 : f32
    %98 = vector.broadcast %cst_16 : f32 to vector<1x128xf32>
    %99 = arith.mulf %98, %56 : vector<1x128xf32>
    %cst_17 = arith.constant 3.000000e+00 : f32
    %100 = vector.broadcast %cst_17 : f32 to vector<1x128xf32>
    %101 = arith.subf %100, %99 : vector<1x128xf32>
    %102 = arith.mulf %101, %56 : vector<1x128xf32>
    %103 = arith.mulf %102, %56 : vector<1x128xf32>
    %cst_18 = arith.constant 2.000000e+00 : f32
    %104 = vector.broadcast %cst_18 : f32 to vector<1x128xf32>
    %105 = arith.mulf %104, %57 : vector<1x128xf32>
    %cst_19 = arith.constant 3.000000e+00 : f32
    %106 = vector.broadcast %cst_19 : f32 to vector<1x128xf32>
    %107 = arith.subf %106, %105 : vector<1x128xf32>
    %108 = arith.mulf %107, %57 : vector<1x128xf32>
    %109 = arith.mulf %108, %57 : vector<1x128xf32>
    %110 = arith.subf %85, %65 : vector<8x128xf32>
    %111 = vector.broadcast %103 : vector<1x128xf32> to vector<8x128xf32>
    %112 = arith.mulf %111, %110 : vector<8x128xf32>
    %113 = arith.addf %65, %112 : vector<8x128xf32>
    %114 = arith.subf %97, %75 : vector<8x128xf32>
    %115 = vector.broadcast %103 : vector<1x128xf32> to vector<8x128xf32>
    %116 = arith.mulf %115, %114 : vector<8x128xf32>
    %117 = arith.addf %75, %116 : vector<8x128xf32>
    %118 = arith.subf %117, %113 : vector<8x128xf32>
    %119 = vector.broadcast %109 : vector<1x128xf32> to vector<8x128xf32>
    %120 = arith.mulf %119, %118 : vector<8x128xf32>
    %121 = arith.addf %113, %120 : vector<8x128xf32>
    %122 = arith.addf %2, %121 : vector<8x128xf32>
    %cst_20 = arith.constant 8.000000e+00 : f32
    %123 = vector.broadcast %cst_20 : f32 to vector<2x128xf32>
    %124 = arith.mulf %0, %123 : vector<2x128xf32>
    %cst_21 = arith.constant 1.250000e-01 : f32
    %125 = vector.broadcast %cst_21 : f32 to vector<2x128xf32>
    %126 = arith.mulf %124, %125 : vector<2x128xf32>
    %cst_22 = arith.constant 0.000000e+00 : f32
    %127 = vector.broadcast %cst_22 : f32 to vector<2x128xf32>
    %128 = arith.cmpf olt, %126, %127 : vector<2x128xf32>
    %129 = math.ceil %126 : vector<2x128xf32>
    %130 = math.floor %126 : vector<2x128xf32>
    %131 = arith.select %128, %129, %130 : vector<2x128xi1>, vector<2x128xf32>
    %cst_23 = arith.constant 8.000000e+00 : f32
    %132 = vector.broadcast %cst_23 : f32 to vector<2x128xf32>
    %133 = arith.mulf %131, %132 : vector<2x128xf32>
    %134 = arith.subf %124, %133 : vector<2x128xf32>
    %cst_24 = arith.constant 0.000000e+00 : f32
    %135 = vector.broadcast %cst_24 : f32 to vector<2x128xf32>
    %136 = arith.cmpf olt, %134, %135 : vector<2x128xf32>
    %137 = math.ceil %134 : vector<2x128xf32>
    %138 = math.floor %134 : vector<2x128xf32>
    %139 = arith.select %136, %137, %138 : vector<2x128xi1>, vector<2x128xf32>
    %140 = arith.subf %134, %139 : vector<2x128xf32>
    %141 = math.floor %134 : vector<2x128xf32>
    %142 = arith.fptosi %141 : vector<2x128xf32> to vector<2x128xi32>
    %c1_i32_25 = arith.constant 1 : i32
    %143 = vector.broadcast %c1_i32_25 : i32 to vector<2x128xi32>
    %144 = arith.addi %142, %143 : vector<2x128xi32>
    %c8_i32 = arith.constant 8 : i32
    %145 = vector.broadcast %c8_i32 : i32 to vector<2x128xi32>
    %146 = arith.minsi %144, %145 : vector<2x128xi32>
    %147 = vector.extract_strided_slice %142 {offsets = [0, 0], sizes = [1, 128], strides = [1, 1]} : vector<2x128xi32> to vector<1x128xi32>
    %148 = vector.extract_strided_slice %142 {offsets = [1, 0], sizes = [1, 128], strides = [1, 1]} : vector<2x128xi32> to vector<1x128xi32>
    %149 = vector.extract_strided_slice %146 {offsets = [0, 0], sizes = [1, 128], strides = [1, 1]} : vector<2x128xi32> to vector<1x128xi32>
    %150 = vector.extract_strided_slice %146 {offsets = [1, 0], sizes = [1, 128], strides = [1, 1]} : vector<2x128xi32> to vector<1x128xi32>
    %c9_i32 = arith.constant 9 : i32
    %151 = vector.broadcast %c9_i32 : i32 to vector<1x128xi32>
    %152 = arith.muli %147, %151 : vector<1x128xi32>
    %153 = arith.addi %152, %148 : vector<1x128xi32>
    %c9_i32_26 = arith.constant 9 : i32
    %154 = vector.broadcast %c9_i32_26 : i32 to vector<1x128xi32>
    %155 = arith.muli %147, %154 : vector<1x128xi32>
    %156 = arith.addi %155, %150 : vector<1x128xi32>
    %c9_i32_27 = arith.constant 9 : i32
    %157 = vector.broadcast %c9_i32_27 : i32 to vector<1x128xi32>
    %158 = arith.muli %149, %157 : vector<1x128xi32>
    %159 = arith.addi %158, %148 : vector<1x128xi32>
    %c9_i32_28 = arith.constant 9 : i32
    %160 = vector.broadcast %c9_i32_28 : i32 to vector<1x128xi32>
    %161 = arith.muli %149, %160 : vector<1x128xi32>
    %162 = arith.addi %161, %150 : vector<1x128xi32>
    %163 = tpu.concatenate %153, %156, %159, %162 in 1 : vector<1x128xi32>, vector<1x128xi32>, vector<1x128xi32>, vector<1x128xi32> -> vector<1x512xi32>
    %164 = vector.broadcast %163 : vector<1x512xi32> to vector<128x512xi32>
    %165 = arith.cmpi eq, %1, %164 : vector<128x512xi32>
    %166 = arith.extui %165 : vector<128x512xi1> to vector<128x512xi32>
    %167 = arith.sitofp %166 : vector<128x512xi32> to vector<128x512xf32>
    %168 = arith.truncf %167 : vector<128x512xf32> to vector<128x512xbf16>
    %c0_29 = arith.constant 0 : index
    %c0_30 = arith.constant 0 : index
    %169 = vector.load %arg3[%c0_29, %c0_30] : memref<48x128xbf16, #tpu.memory_space<vmem>>, vector<48x128xbf16>
    %cst_31 = arith.constant dense<0.000000e+00> : vector<48x512xf32>
    %170 = tpu.matmul %169, %168, %cst_31 {dimension_numbers = #tpu.dot_dimension_numbers<[1], [0], [0], [1], [0, 0, 1, 1], [], []>} : vector<48x128xbf16>, vector<128x512xbf16>, vector<48x512xf32> -> vector<48x512xf32>
    %171 = vector.extract_strided_slice %170 {offsets = [0, 0], sizes = [16, 512], strides = [1, 1]} : vector<48x512xf32> to vector<16x512xf32>
    %172 = vector.extract_strided_slice %170 {offsets = [16, 0], sizes = [16, 512], strides = [1, 1]} : vector<48x512xf32> to vector<16x512xf32>
    %173 = arith.addf %171, %172 : vector<16x512xf32>
    %174 = vector.extract_strided_slice %170 {offsets = [32, 0], sizes = [16, 512], strides = [1, 1]} : vector<48x512xf32> to vector<16x512xf32>
    %175 = arith.addf %173, %174 : vector<16x512xf32>
    %176 = vector.extract_strided_slice %140 {offsets = [0, 0], sizes = [1, 128], strides = [1, 1]} : vector<2x128xf32> to vector<1x128xf32>
    %177 = vector.extract_strided_slice %140 {offsets = [1, 0], sizes = [1, 128], strides = [1, 1]} : vector<2x128xf32> to vector<1x128xf32>
    %178 = vector.extract_strided_slice %175 {offsets = [0, 0], sizes = [16, 128], strides = [1, 1]} : vector<16x512xf32> to vector<16x128xf32>
    %179 = vector.extract_strided_slice %178 {offsets = [0, 0], sizes = [8, 128], strides = [1, 1]} : vector<16x128xf32> to vector<8x128xf32>
    %180 = vector.broadcast %176 : vector<1x128xf32> to vector<8x128xf32>
    %181 = arith.mulf %179, %180 : vector<8x128xf32>
    %182 = vector.extract_strided_slice %178 {offsets = [8, 0], sizes = [8, 128], strides = [1, 1]} : vector<16x128xf32> to vector<8x128xf32>
    %183 = vector.broadcast %177 : vector<1x128xf32> to vector<8x128xf32>
    %184 = arith.mulf %182, %183 : vector<8x128xf32>
    %185 = arith.addf %181, %184 : vector<8x128xf32>
    %cst_32 = arith.constant 1.000000e+00 : f32
    %186 = vector.broadcast %cst_32 : f32 to vector<1x128xf32>
    %187 = arith.subf %177, %186 : vector<1x128xf32>
    %188 = vector.extract_strided_slice %175 {offsets = [0, 128], sizes = [16, 128], strides = [1, 1]} : vector<16x512xf32> to vector<16x128xf32>
    %189 = vector.extract_strided_slice %188 {offsets = [0, 0], sizes = [8, 128], strides = [1, 1]} : vector<16x128xf32> to vector<8x128xf32>
    %190 = vector.broadcast %176 : vector<1x128xf32> to vector<8x128xf32>
    %191 = arith.mulf %189, %190 : vector<8x128xf32>
    %192 = vector.extract_strided_slice %188 {offsets = [8, 0], sizes = [8, 128], strides = [1, 1]} : vector<16x128xf32> to vector<8x128xf32>
    %193 = vector.broadcast %187 : vector<1x128xf32> to vector<8x128xf32>
    %194 = arith.mulf %192, %193 : vector<8x128xf32>
    %195 = arith.addf %191, %194 : vector<8x128xf32>
    %cst_33 = arith.constant 1.000000e+00 : f32
    %196 = vector.broadcast %cst_33 : f32 to vector<1x128xf32>
    %197 = arith.subf %176, %196 : vector<1x128xf32>
    %198 = vector.extract_strided_slice %175 {offsets = [0, 256], sizes = [16, 128], strides = [1, 1]} : vector<16x512xf32> to vector<16x128xf32>
    %199 = vector.extract_strided_slice %198 {offsets = [0, 0], sizes = [8, 128], strides = [1, 1]} : vector<16x128xf32> to vector<8x128xf32>
    %200 = vector.broadcast %197 : vector<1x128xf32> to vector<8x128xf32>
    %201 = arith.mulf %199, %200 : vector<8x128xf32>
    %202 = vector.extract_strided_slice %198 {offsets = [8, 0], sizes = [8, 128], strides = [1, 1]} : vector<16x128xf32> to vector<8x128xf32>
    %203 = vector.broadcast %177 : vector<1x128xf32> to vector<8x128xf32>
    %204 = arith.mulf %202, %203 : vector<8x128xf32>
    %205 = arith.addf %201, %204 : vector<8x128xf32>
    %cst_34 = arith.constant 1.000000e+00 : f32
    %206 = vector.broadcast %cst_34 : f32 to vector<1x128xf32>
    %207 = arith.subf %176, %206 : vector<1x128xf32>
    %cst_35 = arith.constant 1.000000e+00 : f32
    %208 = vector.broadcast %cst_35 : f32 to vector<1x128xf32>
    %209 = arith.subf %177, %208 : vector<1x128xf32>
    %210 = vector.extract_strided_slice %175 {offsets = [0, 384], sizes = [16, 128], strides = [1, 1]} : vector<16x512xf32> to vector<16x128xf32>
    %211 = vector.extract_strided_slice %210 {offsets = [0, 0], sizes = [8, 128], strides = [1, 1]} : vector<16x128xf32> to vector<8x128xf32>
    %212 = vector.broadcast %207 : vector<1x128xf32> to vector<8x128xf32>
    %213 = arith.mulf %211, %212 : vector<8x128xf32>
    %214 = vector.extract_strided_slice %210 {offsets = [8, 0], sizes = [8, 128], strides = [1, 1]} : vector<16x128xf32> to vector<8x128xf32>
    %215 = vector.broadcast %209 : vector<1x128xf32> to vector<8x128xf32>
    %216 = arith.mulf %214, %215 : vector<8x128xf32>
    %217 = arith.addf %213, %216 : vector<8x128xf32>
    %cst_36 = arith.constant 2.000000e+00 : f32
    %218 = vector.broadcast %cst_36 : f32 to vector<1x128xf32>
    %219 = arith.mulf %218, %176 : vector<1x128xf32>
    %cst_37 = arith.constant 3.000000e+00 : f32
    %220 = vector.broadcast %cst_37 : f32 to vector<1x128xf32>
    %221 = arith.subf %220, %219 : vector<1x128xf32>
    %222 = arith.mulf %221, %176 : vector<1x128xf32>
    %223 = arith.mulf %222, %176 : vector<1x128xf32>
    %cst_38 = arith.constant 2.000000e+00 : f32
    %224 = vector.broadcast %cst_38 : f32 to vector<1x128xf32>
    %225 = arith.mulf %224, %177 : vector<1x128xf32>
    %cst_39 = arith.constant 3.000000e+00 : f32
    %226 = vector.broadcast %cst_39 : f32 to vector<1x128xf32>
    %227 = arith.subf %226, %225 : vector<1x128xf32>
    %228 = arith.mulf %227, %177 : vector<1x128xf32>
    %229 = arith.mulf %228, %177 : vector<1x128xf32>
    %230 = arith.subf %205, %185 : vector<8x128xf32>
    %231 = vector.broadcast %223 : vector<1x128xf32> to vector<8x128xf32>
    %232 = arith.mulf %231, %230 : vector<8x128xf32>
    %233 = arith.addf %185, %232 : vector<8x128xf32>
    %234 = arith.subf %217, %195 : vector<8x128xf32>
    %235 = vector.broadcast %223 : vector<1x128xf32> to vector<8x128xf32>
    %236 = arith.mulf %235, %234 : vector<8x128xf32>
    %237 = arith.addf %195, %236 : vector<8x128xf32>
    %238 = arith.subf %237, %233 : vector<8x128xf32>
    %239 = vector.broadcast %229 : vector<1x128xf32> to vector<8x128xf32>
    %240 = arith.mulf %239, %238 : vector<8x128xf32>
    %241 = arith.addf %233, %240 : vector<8x128xf32>
    %242 = arith.addf %122, %241 : vector<8x128xf32>
    %c0_40 = arith.constant 0 : index
    %c0_41 = arith.constant 0 : index
    %243 = vector.load %arg4[%c0_40, %c0_41] : memref<8x128xf32, #tpu.memory_space<vmem>>, vector<8x128xf32>
    tpu.vector_store %arg4[%c0_40, %c0_41], %242 {strides = array<i32>} : memref<8x128xf32, #tpu.memory_space<vmem>>, vector<8x128xf32>,
    return
  }
  func.func @transform_0(%arg0: i32) -> (i32, i32) {
    %c0_i32 = arith.constant 0 : i32
    %c0_i32_0 = arith.constant 0 : i32
    return %c0_i32, %arg0 : i32, i32
  }
  func.func @transform_1(%arg0: i32) -> (i32, i32) {
    %c0_i32 = arith.constant 0 : i32
    %c0_i32_0 = arith.constant 0 : i32
    %c0_i32_1 = arith.constant 0 : i32
    return %c0_i32, %c0_i32_0 : i32, i32
  }
  func.func @transform_2(%arg0: i32) -> (i32, i32) {
    %c0_i32 = arith.constant 0 : i32
    %c0_i32_0 = arith.constant 0 : i32
    %c0_i32_1 = arith.constant 0 : i32
    return %c0_i32, %c0_i32_0 : i32, i32
  }
  func.func @transform_3(%arg0: i32) -> (i32, i32) {
    %c0_i32 = arith.constant 0 : i32
    %c0_i32_0 = arith.constant 0 : i32
    return %c0_i32, %arg0 : i32, i32
  }
}

</mosaic_0001>

<llo_original>
// kernel: tpu_custom_call.1
$region0: #{tpu_custom_call.1}
  #allocation0 [shape = 'u32[]', space=smem, size = 0x4, offset = 0x4, fixed_abs, tag = 'smem constant byte address 0x4 - core index']
  #allocation1 [shape = 'u32[72,128]{1,0:T(1,128)}', space=vmem, size = 0x9000, scoped, tag = 'internal scratch']
  %s0 = inlined_call_operand.hbm [shape: f32[2,256], index: 0, kind: input, shape index: {}]
  %s1 = inlined_call_operand.hbm [shape: bf16[48,128], index: 1, kind: input, shape index: {}]
  %s2 = inlined_call_operand.hbm [shape: bf16[48,128], index: 2, kind: input, shape index: {}]
  %s3 = inlined_call_operand.hbm [shape: f32[8,256], index: 3, kind: output, shape index: {}]
  %s4 = sld [smem:[#allocation0]]
  $region57: #{tpu_custom_call.1} parent=0
    _
  %s6 = ssub.s32 1, %s4
  %s7 = scalar_select 0, %s6, %s4
  $region1: #{tpu_custom_call.1} parent=0
    #allocation2 [shape = 'u8[2048]{0}', space=vmem, size = 0x800, scoped, tag = 'input window, operand 0']
    #allocation3 [shape = 's32[2]{0}', space=sflag, size = 0x8, scoped, tag = 'scoped memory for tpu_custom_call.1']
    #allocation4 [shape = 's32[2]{0}', space=sflag, size = 0x8, scoped, tag = 'scoped memory for tpu_custom_call.1']
    #allocation5 [shape = 'u8[12288]{0}', space=vmem, size = 0x3000, scoped, tag = 'input window, operand 1, single buffered']
    #allocation6 [shape = 's32[1]{0}', space=sflag, size = 0x4, scoped, tag = 'scoped memory for tpu_custom_call.1']
    #allocation7 [shape = 'u8[12288]{0}', space=vmem, size = 0x3000, scoped, tag = 'input window, operand 2, single buffered']
    #allocation8 [shape = 'u8[8192]{0}', space=vmem, size = 0x2000, scoped, tag = 'output window, operand 0']
    %8 = vsyncpa [#allocation3], 0
    %s9 = scalar_lea.sflag [#allocation3], 1
    %10 = vsyncpa %s9, 0
    %11 = vsyncpa [#allocation6], 0
    %12 = vsyncpa [#allocation4], 0
    %s13 = scalar_lea.sflag [#allocation4], 1
    %14 = vsyncpa %s13, 0
    loop: start=0, step=1, limit=4
    $region2: #{tpu_custom_call.1} parent=1 // loop_pre_header
      _
    $region3: #{tpu_custom_call.1} parent=1 // loop_header
      %s16 = sphi 0, %s20
      %p17 = scmp.ge.s32.totalorder %s16, 4
      %s26 = sphi 0, %s28
      %s29 = sphi 0, %s26
      %s30 = sphi 0, %s29
      %s46 = sphi 0, %s30
      %s50 = sphi 0, %s50
      %s52 = sphi 0, %s50
      %s53 = sphi 0, %s52
      %s67 = sphi 0, %s53
      %s71 = sphi 0, %s71
      %s73 = sphi 0, %s71
      %s74 = sphi 0, %s73
      %s88 = sphi 0, %s74
      %s94 = sphi 0, %s96
      %s97 = sphi 0, %s94
      %s98 = sphi 0, %s97
      %s114 = sphi 0, %s98
    $region4: #{tpu_custom_call.1} parent=1 // loop_header_branch
      %19 = sbr.rel (%p17) target = $region8
    $region5: #{tpu_custom_call.1} parent=1 // loop_body
      %s21 = ssub.s32 %s16, 1
      %s22 = ssub.s32 %s16, 2
      %s23 = sadd.s32 %s16, 1
      %s24 = ssub.s32 %s16, %s23
      %p25 = scmp.eq.s32.totalorder %s24, 0
      %s27 = sadd.s32 %s26, 1
      %s28 = scalar_select %p25, %s26, %s27
      %p31 = pneg %p25
      %p32 = scmp.eq.s32.totalorder %s16, 1
      %p33 = por %p31, %p32
      %p34 = scmp.ne.s32.totalorder %s26, %s29
      %p35 = scmp.eq.s32.totalorder %s16, 0
      %p36 = por %p34, %p35
      %p37 = scmp.ne.s32.totalorder %s26, %s29
      %p38 = scmp.eq.s32.totalorder %s21, 1
      %p39 = por %p37, %p38
      %p40 = scmp.ne.s32.totalorder %s29, %s30
      %p41 = scmp.eq.s32.totalorder %s21, 0
      %p42 = por %p40, %p41
      %p43 = scmp.ne.s32.totalorder %s29, %s30
      %p44 = scmp.eq.s32.totalorder %s22, 1
      %p45 = por %p43, %p44
      %p47 = scmp.ne.s32.totalorder %s30, %s46
      %p48 = scmp.eq.s32.totalorder %s22, 0
      %p49 = por %p47, %p48
      %s51 = sadd.s32 %s50, 1
      %p54 = scmp.eq.s32.totalorder %s16, 1
      %p55 = scmp.ne.s32.totalorder %s50, %s52
      %p56 = scmp.eq.s32.totalorder %s16, 0
      %p57 = por %p55, %p56
      %p58 = scmp.ne.s32.totalorder %s50, %s52
      %p59 = scmp.eq.s32.totalorder %s21, 1
      %p60 = por %p58, %p59
      %p61 = scmp.ne.s32.totalorder %s52, %s53
      %p62 = scmp.eq.s32.totalorder %s21, 0
      %p63 = por %p61, %p62
      %p64 = scmp.ne.s32.totalorder %s52, %s53
      %p65 = scmp.eq.s32.totalorder %s22, 1
      %p66 = por %p64, %p65
      %p68 = scmp.ne.s32.totalorder %s53, %s67
      %p69 = scmp.eq.s32.totalorder %s22, 0
      %p70 = por %p68, %p69
      %s72 = sadd.s32 %s71, 1
      %p75 = scmp.eq.s32.totalorder %s16, 1
      %p76 = scmp.ne.s32.totalorder %s71, %s73
      %p77 = scmp.eq.s32.totalorder %s16, 0
      %p78 = por %p76, %p77
      %p79 = scmp.ne.s32.totalorder %s71, %s73
      %p80 = scmp.eq.s32.totalorder %s21, 1
      %p81 = por %p79, %p80
      %p82 = scmp.ne.s32.totalorder %s73, %s74
      %p83 = scmp.eq.s32.totalorder %s21, 0
      %p84 = por %p82, %p83
      %p85 = scmp.ne.s32.totalorder %s73, %s74
      %p86 = scmp.eq.s32.totalorder %s22, 1
      %p87 = por %p85, %p86
      %p89 = scmp.ne.s32.totalorder %s74, %s88
      %p90 = scmp.eq.s32.totalorder %s22, 0
      %p91 = por %p89, %p90
      %s92 = ssub.s32 %s16, %s23
      %p93 = scmp.eq.s32.totalorder %s92, 0
      %s95 = sadd.s32 %s94, 1
      %s96 = scalar_select %p93, %s94, %s95
      %p99 = pneg %p93
      %p100 = scmp.eq.s32.totalorder %s16, 1
      %p101 = por %p99, %p100
      %p102 = scmp.ne.s32.totalorder %s94, %s97
      %p103 = scmp.eq.s32.totalorder %s16, 0
      %p104 = por %p102, %p103
      %p105 = scmp.ne.s32.totalorder %s94, %s97
      %p106 = scmp.eq.s32.totalorder %s21, 1
      %p107 = por %p105, %p106
      %p108 = scmp.ne.s32.totalorder %s97, %s98
      %p109 = scmp.eq.s32.totalorder %s21, 0
      %p110 = por %p108, %p109
      %p111 = scmp.ne.s32.totalorder %s97, %s98
      %p112 = scmp.eq.s32.totalorder %s22, 1
      %p113 = por %p111, %p112
      %p115 = scmp.ne.s32.totalorder %s98, %s114
      %p116 = scmp.eq.s32.totalorder %s22, 0
      %p117 = por %p115, %p116
      %p118 = scmp.le.s32.totalorder 1, %s16
      %p119 = scmp.lt.s32.totalorder %s16, 3
      %p120 = pnand %p118, %p119
      %p121 = pneg %p120
      // Predicated region
      $region9: #{tpu_custom_call.1} parent=5 // pred_check
        _
      $region10: #{tpu_custom_call.1} parent=5 // pred_check_branch
        %123 = sbr.rel (%p120) target = $region12
      $region11: #{tpu_custom_call.1} parent=5 // pred_region
        %s124 = ssub.s32 %s16, 1
        // Predicated region
        $region13: #{tpu_custom_call.1} parent=11 // pred_check
          %p125 = pneg %p63
        $region14: #{tpu_custom_call.1} parent=11 // pred_check_branch
          %127 = sbr.rel (%p125) target = $region16
        $region15: #{tpu_custom_call.1} parent=11 // pred_region
          %129 = vsyncadd [#allocation6], 0
          %s130 = sshll.u32 %s1, 4
          %s131 = int_to_ptr.hbm [resolvable:$true] %s130
          %s132 = sshll.u32 [#allocation5], 4
          %s133 = int_to_ptr.vmem [resolvable:$true] %s132
          %138 = dma.hbm_to_vmem [thread:$0]  %s131, 384, %s133, [#allocation6], 64, 64, 4
        $region16: #{tpu_custom_call.1} parent=11 // pred_fallthru
          _
        // Predicated region
        $region17: #{tpu_custom_call.1} parent=11 // pred_check
          %p139 = pneg %p84
        $region18: #{tpu_custom_call.1} parent=11 // pred_check_branch
          %141 = sbr.rel (%p139) target = $region20
        $region19: #{tpu_custom_call.1} parent=11 // pred_region
          %143 = vsyncadd [#allocation6], 0
          %s144 = sshll.u32 %s2, 4
          %s145 = int_to_ptr.hbm [resolvable:$true] %s144
          %s146 = sshll.u32 [#allocation7], 4
          %s147 = int_to_ptr.vmem [resolvable:$true] %s146
          %152 = dma.hbm_to_vmem [thread:$0]  %s145, 384, %s147, [#allocation6], 64, 64, 4
        $region20: #{tpu_custom_call.1} parent=11 // pred_fallthru
          _
      $region12: #{tpu_custom_call.1} parent=5 // pred_fallthru
        _
      %p153 = scmp.lt.s32.totalorder %s16, 2
      // Predicated region
      $region21: #{tpu_custom_call.1} parent=5 // pred_check
        %p154 = pneg %p153
      $region22: #{tpu_custom_call.1} parent=5 // pred_check_branch
        %156 = sbr.rel (%p154) target = $region24
      $region23: #{tpu_custom_call.1} parent=5 // pred_region
        // Predicated region
        $region25: #{tpu_custom_call.1} parent=23 // pred_check
          %p157 = pneg %p36
        $region26: #{tpu_custom_call.1} parent=23 // pred_check_branch
          %159 = sbr.rel (%p157) target = $region28
        $region27: #{tpu_custom_call.1} parent=23 // pred_region
          %s160 = sand.u32 %s26, 1
          %s161 = scalar_lea.sflag [#allocation3], %s160
          %s162 = sand.u32 %s26, 1
          %s163 = smul.addr %s162, 2
          %s164 = scalar_lea.vmem [#allocation2], %s163
          %166 = vsyncadd %s161, 0
          %s167 = smul.addr %s16, 2
          %s168 = scalar_lea.hbm %s0, %s167
          %s170 = sshll.u32 %s168, 4
          %s171 = int_to_ptr.hbm [resolvable:$true] %s170
          %s172 = sshll.u32 %s164, 4
          %s173 = int_to_ptr.vmem [resolvable:$true] %s172
          %175 = dma.hbm_to_vmem [thread:$0]  %s171, 32, %s173, %s161
        $region28: #{tpu_custom_call.1} parent=23 // pred_fallthru
          _
      $region24: #{tpu_custom_call.1} parent=5 // pred_fallthru
        _
      %p176 = scmp.le.s32.totalorder 1, %s16
      %p177 = scmp.lt.s32.totalorder %s16, 3
      %p178 = pnand %p176, %p177
      %p179 = pneg %p178
      // Predicated region
      $region29: #{tpu_custom_call.1} parent=5 // pred_check
        _
      $region30: #{tpu_custom_call.1} parent=5 // pred_check_branch
        %181 = sbr.rel (%p178) target = $region32
      $region31: #{tpu_custom_call.1} parent=5 // pred_region
        %s182 = ssub.s32 %s16, 1
        %s183 = sand.u32 %s29, 1
        %s184 = scalar_lea.sflag [#allocation3], %s183
        %s185 = sand.u32 %s29, 1
        %s186 = smul.addr %s185, 2
        %s187 = scalar_lea.vmem [#allocation2], %s186
        // Predicated region
        $region33: #{tpu_custom_call.1} parent=31 // pred_check
          %p188 = pneg %p42
        $region34: #{tpu_custom_call.1} parent=31 // pred_check_branch
          %190 = sbr.rel (%p188) target = $region36
        $region35: #{tpu_custom_call.1} parent=31 // pred_region
          %192 = dma.done %s184, 32
        $region36: #{tpu_custom_call.1} parent=31 // pred_fallthru
          _
        // Predicated region
        $region37: #{tpu_custom_call.1} parent=31 // pred_check
          %p193 = pneg %p63
        $region38: #{tpu_custom_call.1} parent=31 // pred_check_branch
          %195 = sbr.rel (%p193) target = $region40
        $region39: #{tpu_custom_call.1} parent=31 // pred_region
          %197 = dma.done [#allocation6], 384
        $region40: #{tpu_custom_call.1} parent=31 // pred_fallthru
          _
        // Predicated region
        $region41: #{tpu_custom_call.1} parent=31 // pred_check
          %p198 = pneg %p84
        $region42: #{tpu_custom_call.1} parent=31 // pred_check_branch
          %200 = sbr.rel (%p198) target = $region44
        $region43: #{tpu_custom_call.1} parent=31 // pred_region
          %202 = dma.done [#allocation6], 384
        $region44: #{tpu_custom_call.1} parent=31 // pred_fallthru
          _
        %s203 = sand.u32 %s29, 1
        %s204 = scalar_lea.sflag [#allocation3], %s203
        %s205 = sand.u32 %s29, 1
        %s206 = smul.addr %s205, 2
        %s207 = scalar_lea.vmem [#allocation2], %s206
        %p208 = pneg %p42
        %p209 = pneg %p39
        %p210 = pneg %p63
        %p211 = pneg %p60
        %p212 = pneg %p84
        %p213 = pneg %p81
        %p214 = pneg %p110
        %p215 = pneg %p107
        %s216 = sand.u32 %s97, 1
        %s217 = scalar_lea.sflag [#allocation4], %s216
        %s218 = sand.u32 %s97, 1
        %s219 = smul.addr %s218, 8
        %s220 = scalar_lea.vmem [#allocation8], %s219
        %v221 = vld [vmem:[%s187] sm:$0x3]
        %v222 = vlaneseq
        %v223 = vshrl.u32 %v222, 7
        %v224 = vadd.s32 %v223, 8
        %v225 = vadd.s32 %v223, 16
        %v226 = vadd.s32 %v223, 24
        %v227 = vadd.s32 %v223, 32
        %v228 = vadd.s32 %v223, 40
        %v229 = vadd.s32 %v223, 48
        %v230 = vadd.s32 %v223, 56
        %v231 = vadd.s32 %v223, 64
        %v232 = vadd.s32 %v223, 72
        %v233 = vadd.s32 %v223, 80
        %v234 = vadd.s32 %v223, 88
        %v235 = vadd.s32 %v223, 96
        %v236 = vadd.s32 %v223, 104
        %v237 = vadd.s32 %v223, 112
        %v238 = vadd.s32 %v223, 120
        %v239 = vmul.f32 %v221, 4.0
        %v240 = vmul.f32 %v239, 0.25
        %vm241 = vcmp.lt.f32.partialorder %v240, 0.0
        %v242 = vceil.f32 %v240
        %v243 = vfloor.f32 %v240
        %v244 = vsel %vm241, %v242, %v243
        %v245 = vmul.f32 %v244, 4.0
        %v246 = vsub.f32 %v239, %v245
        %vm247 = vcmp.lt.f32.partialorder %v246, 0.0
        %v248 = vceil.f32 %v246
        %v249 = vfloor.f32 %v246
        %v250 = vsel %vm247, %v248, %v249
        %v251 = vsub.f32 %v246, %v250
        %v252 = vcvt.f32.s32.to.zero.pseudo %v249
        %v253 = vadd.s32 %v252, 1
        %vm254 = vcmp.lt.s32.totalorder %v253, 4
        %v255 = vsel %vm254, %v253, 4
        %v256 = vmul.u32 %v252, 5
        %v257 = vrot.slane %v252, 1
        %v258 = vadd.s32 %v256, %v257
        %v259 = vrot.slane %v255, 1
        %v260 = vadd.s32 %v256, %v259
        %v261 = vmul.u32 %v255, 5
        %v262 = vadd.s32 %v261, %v257
        %v263 = vadd.s32 %v261, %v259
        %v264 = vperm.slane %v258, 0
        %v265 = vperm.slane %v260, 0
        %v266 = vperm.slane %v262, 0
        %v267 = vperm.slane %v263, 0
        %vm268 = vcmp.eq.s32.totalorder %v223, %v264
        %vm269 = vcmp.eq.s32.totalorder %v223, %v265
        %vm270 = vcmp.eq.s32.totalorder %v223, %v266
        %vm271 = vcmp.eq.s32.totalorder %v223, %v267
        %vm272 = vcmp.eq.s32.totalorder %v224, %v264
        %vm273 = vcmp.eq.s32.totalorder %v224, %v265
        %vm274 = vcmp.eq.s32.totalorder %v224, %v266
        %vm275 = vcmp.eq.s32.totalorder %v224, %v267
        %vm276 = vcmp.eq.s32.totalorder %v225, %v264
        %vm277 = vcmp.eq.s32.totalorder %v225, %v265
        %vm278 = vcmp.eq.s32.totalorder %v225, %v266
        %vm279 = vcmp.eq.s32.totalorder %v225, %v267
        %vm280 = vcmp.eq.s32.totalorder %v226, %v264
        %vm281 = vcmp.eq.s32.totalorder %v226, %v265
        %vm282 = vcmp.eq.s32.totalorder %v226, %v266
        %vm283 = vcmp.eq.s32.totalorder %v226, %v267
        %vm284 = vcmp.eq.s32.totalorder %v227, %v264
        %vm285 = vcmp.eq.s32.totalorder %v227, %v265
        %vm286 = vcmp.eq.s32.totalorder %v227, %v266
        %vm287 = vcmp.eq.s32.totalorder %v227, %v267
        %vm288 = vcmp.eq.s32.totalorder %v228, %v264
        %vm289 = vcmp.eq.s32.totalorder %v228, %v265
        %vm290 = vcmp.eq.s32.totalorder %v228, %v266
        %vm291 = vcmp.eq.s32.totalorder %v228, %v267
        %vm292 = vcmp.eq.s32.totalorder %v229, %v264
        %vm293 = vcmp.eq.s32.totalorder %v229, %v265
        %vm294 = vcmp.eq.s32.totalorder %v229, %v266
        %vm295 = vcmp.eq.s32.totalorder %v229, %v267
        %vm296 = vcmp.eq.s32.totalorder %v230, %v264
        %vm297 = vcmp.eq.s32.totalorder %v230, %v265
        %vm298 = vcmp.eq.s32.totalorder %v230, %v266
        %vm299 = vcmp.eq.s32.totalorder %v230, %v267
        %vm300 = vcmp.eq.s32.totalorder %v231, %v264
        %vm301 = vcmp.eq.s32.totalorder %v231, %v265
        %vm302 = vcmp.eq.s32.totalorder %v231, %v266
        %vm303 = vcmp.eq.s32.totalorder %v231, %v267
        %vm304 = vcmp.eq.s32.totalorder %v232, %v264
        %vm305 = vcmp.eq.s32.totalorder %v232, %v265
        %vm306 = vcmp.eq.s32.totalorder %v232, %v266
        %vm307 = vcmp.eq.s32.totalorder %v232, %v267
        %vm308 = vcmp.eq.s32.totalorder %v233, %v264
        %vm309 = vcmp.eq.s32.totalorder %v233, %v265
        %vm310 = vcmp.eq.s32.totalorder %v233, %v266
        %vm311 = vcmp.eq.s32.totalorder %v233, %v267
        %vm312 = vcmp.eq.s32.totalorder %v234, %v264
        %vm313 = vcmp.eq.s32.totalorder %v234, %v265
        %vm314 = vcmp.eq.s32.totalorder %v234, %v266
        %vm315 = vcmp.eq.s32.totalorder %v234, %v267
        %vm316 = vcmp.eq.s32.totalorder %v235, %v264
        %vm317 = vcmp.eq.s32.totalorder %v235, %v265
        %vm318 = vcmp.eq.s32.totalorder %v235, %v266
        %vm319 = vcmp.eq.s32.totalorder %v235, %v267
        %vm320 = vcmp.eq.s32.totalorder %v236, %v264
        %vm321 = vcmp.eq.s32.totalorder %v236, %v265
        %vm322 = vcmp.eq.s32.totalorder %v236, %v266
        %vm323 = vcmp.eq.s32.totalorder %v236, %v267
        %vm324 = vcmp.eq.s32.totalorder %v237, %v264
        %vm325 = vcmp.eq.s32.totalorder %v237, %v265
        %vm326 = vcmp.eq.s32.totalorder %v237, %v266
        %vm327 = vcmp.eq.s32.totalorder %v237, %v267
        %vm328 = vcmp.eq.s32.totalorder %v238, %v264
        %vm329 = vcmp.eq.s32.totalorder %v238, %v265
        %vm330 = vcmp.eq.s32.totalorder %v238, %v266
        %vm331 = vcmp.eq.s32.totalorder %v238, %v267
        %v332 = vsel %vm268, 1, 0
        %v333 = vsel %vm269, 1, 0
        %v334 = vsel %vm270, 1, 0
        %v335 = vsel %vm271, 1, 0
        %v336 = vsel %vm272, 1, 0
        %v337 = vsel %vm273, 1, 0
        %v338 = vsel %vm274, 1, 0
        %v339 = vsel %vm275, 1, 0
        %v340 = vsel %vm276, 1, 0
        %v341 = vsel %vm277, 1, 0
        %v342 = vsel %vm278, 1, 0
        %v343 = vsel %vm279, 1, 0
        %v344 = vsel %vm280, 1, 0
        %v345 = vsel %vm281, 1, 0
        %v346 = vsel %vm282, 1, 0
        %v347 = vsel %vm283, 1, 0
        %v348 = vsel %vm284, 1, 0
        %v349 = vsel %vm285, 1, 0
        %v350 = vsel %vm286, 1, 0
        %v351 = vsel %vm287, 1, 0
        %v352 = vsel %vm288, 1, 0
        %v353 = vsel %vm289, 1, 0
        %v354 = vsel %vm290, 1, 0
        %v355 = vsel %vm291, 1, 0
        %v356 = vsel %vm292, 1, 0
        %v357 = vsel %vm293, 1, 0
        %v358 = vsel %vm294, 1, 0
        %v359 = vsel %vm295, 1, 0
        %v360 = vsel %vm296, 1, 0
        %v361 = vsel %vm297, 1, 0
        %v362 = vsel %vm298, 1, 0
        %v363 = vsel %vm299, 1, 0
        %v364 = vsel %vm300, 1, 0
        %v365 = vsel %vm301, 1, 0
        %v366 = vsel %vm302, 1, 0
        %v367 = vsel %vm303, 1, 0
        %v368 = vsel %vm304, 1, 0
        %v369 = vsel %vm305, 1, 0
        %v370 = vsel %vm306, 1, 0
        %v371 = vsel %vm307, 1, 0
        %v372 = vsel %vm308, 1, 0
        %v373 = vsel %vm309, 1, 0
        %v374 = vsel %vm310, 1, 0
        %v375 = vsel %vm311, 1, 0
        %v376 = vsel %vm312, 1, 0
        %v377 = vsel %vm313, 1, 0
        %v378 = vsel %vm314, 1, 0
        %v379 = vsel %vm315, 1, 0
        %v380 = vsel %vm316, 1, 0
        %v381 = vsel %vm317, 1, 0
        %v382 = vsel %vm318, 1, 0
        %v383 = vsel %vm319, 1, 0
        %v384 = vsel %vm320, 1, 0
        %v385 = vsel %vm321, 1, 0
        %v386 = vsel %vm322, 1, 0
        %v387 = vsel %vm323, 1, 0
        %v388 = vsel %vm324, 1, 0
        %v389 = vsel %vm325, 1, 0
        %v390 = vsel %vm326, 1, 0
        %v391 = vsel %vm327, 1, 0
        %v392 = vsel %vm328, 1, 0
        %v393 = vsel %vm329, 1, 0
        %v394 = vsel %vm330, 1, 0
        %v395 = vsel %vm331, 1, 0
        %v396 = vcvt.s32.f32 %v332
        %v397 = vcvt.s32.f32 %v333
        %v398 = vcvt.s32.f32 %v334
        %v399 = vcvt.s32.f32 %v335
        %v400 = vcvt.s32.f32 %v336
        %v401 = vcvt.s32.f32 %v337
        %v402 = vcvt.s32.f32 %v338
        %v403 = vcvt.s32.f32 %v339
        %v404 = vcvt.s32.f32 %v340
        %v405 = vcvt.s32.f32 %v341
        %v406 = vcvt.s32.f32 %v342
        %v407 = vcvt.s32.f32 %v343
        %v408 = vcvt.s32.f32 %v344
        %v409 = vcvt.s32.f32 %v345
        %v410 = vcvt.s32.f32 %v346
        %v411 = vcvt.s32.f32 %v347
        %v412 = vcvt.s32.f32 %v348
        %v413 = vcvt.s32.f32 %v349
        %v414 = vcvt.s32.f32 %v350
        %v415 = vcvt.s32.f32 %v351
        %v416 = vcvt.s32.f32 %v352
        %v417 = vcvt.s32.f32 %v353
        %v418 = vcvt.s32.f32 %v354
        %v419 = vcvt.s32.f32 %v355
        %v420 = vcvt.s32.f32 %v356
        %v421 = vcvt.s32.f32 %v357
        %v422 = vcvt.s32.f32 %v358
        %v423 = vcvt.s32.f32 %v359
        %v424 = vcvt.s32.f32 %v360
        %v425 = vcvt.s32.f32 %v361
        %v426 = vcvt.s32.f32 %v362
        %v427 = vcvt.s32.f32 %v363
        %v428 = vcvt.s32.f32 %v364
        %v429 = vcvt.s32.f32 %v365
        %v430 = vcvt.s32.f32 %v366
        %v431 = vcvt.s32.f32 %v367
        %v432 = vcvt.s32.f32 %v368
        %v433 = vcvt.s32.f32 %v369
        %v434 = vcvt.s32.f32 %v370
        %v435 = vcvt.s32.f32 %v371
        %v436 = vcvt.s32.f32 %v372
        %v437 = vcvt.s32.f32 %v373
        %v438 = vcvt.s32.f32 %v374
        %v439 = vcvt.s32.f32 %v375
        %v440 = vcvt.s32.f32 %v376
        %v441 = vcvt.s32.f32 %v377
        %v442 = vcvt.s32.f32 %v378
        %v443 = vcvt.s32.f32 %v379
        %v444 = vcvt.s32.f32 %v380
        %v445 = vcvt.s32.f32 %v381
        %v446 = vcvt.s32.f32 %v382
        %v447 = vcvt.s32.f32 %v383
        %v448 = vcvt.s32.f32 %v384
        %v449 = vcvt.s32.f32 %v385
        %v450 = vcvt.s32.f32 %v386
        %v451 = vcvt.s32.f32 %v387
        %v452 = vcvt.s32.f32 %v388
        %v453 = vcvt.s32.f32 %v389
        %v454 = vcvt.s32.f32 %v390
        %v455 = vcvt.s32.f32 %v391
        %v456 = vcvt.s32.f32 %v392
        %v457 = vcvt.s32.f32 %v393
        %v458 = vcvt.s32.f32 %v394
        %v459 = vcvt.s32.f32 %v395
        %v460 = vpack.c.bf16 %v400, %v396
        %v461 = vpack.c.bf16 %v401, %v397
        %v462 = vpack.c.bf16 %v402, %v398
        %v463 = vpack.c.bf16 %v403, %v399
        %v464 = vpack.c.bf16 %v408, %v404
        %v465 = vpack.c.bf16 %v409, %v405
        %v466 = vpack.c.bf16 %v410, %v406
        %v467 = vpack.c.bf16 %v411, %v407
        %v468 = vpack.c.bf16 %v416, %v412
        %v469 = vpack.c.bf16 %v417, %v413
        %v470 = vpack.c.bf16 %v418, %v414
        %v471 = vpack.c.bf16 %v419, %v415
        %v472 = vpack.c.bf16 %v424, %v420
        %v473 = vpack.c.bf16 %v425, %v421
        %v474 = vpack.c.bf16 %v426, %v422
        %v475 = vpack.c.bf16 %v427, %v423
        %v476 = vpack.c.bf16 %v432, %v428
        %v477 = vpack.c.bf16 %v433, %v429
        %v478 = vpack.c.bf16 %v434, %v430
        %v479 = vpack.c.bf16 %v435, %v431
        %v480 = vpack.c.bf16 %v440, %v436
        %v481 = vpack.c.bf16 %v441, %v437
        %v482 = vpack.c.bf16 %v442, %v438
        %v483 = vpack.c.bf16 %v443, %v439
        %v484 = vpack.c.bf16 %v448, %v444
        %v485 = vpack.c.bf16 %v449, %v445
        %v486 = vpack.c.bf16 %v450, %v446
        %v487 = vpack.c.bf16 %v451, %v447
        %v488 = vpack.c.bf16 %v456, %v452
        %v489 = vpack.c.bf16 %v457, %v453
        %v490 = vpack.c.bf16 %v458, %v454
        %v491 = vpack.c.bf16 %v459, %v455
        %v492 = vld [vmem:[#allocation5] sm:$0xf]
        %v493 = vld [vmem:[#allocation5 + $0x4] sm:$0xf]
        %v494 = vld [vmem:[#allocation5 + $0x8] sm:$0xf]
        %v495 = vld [vmem:[#allocation5 + $0xc] sm:$0xf]
        %v496 = vld [vmem:[#allocation5 + $0x10] sm:$0xf]
        %v497 = vld [vmem:[#allocation5 + $0x14] sm:$0xf]
        %v504 = vunpack.c.l.b16 %v492
        %v505 = vunpack.c.l.b16 %v493
        %v506 = vunpack.c.l.b16 %v494
        %v507 = vunpack.c.l.b16 %v495
        %v508 = vunpack.c.l.b16 %v496
        %v509 = vunpack.c.l.b16 %v497
        %v510 = vpack.c.b16 %v505, %v504
        %v511 = vpack.c.b16 %v507, %v506
        %v512 = vpack.c.b16 %v509, %v508
        %516 = vmatpush.bf16.msra.mxu0 %v488
        %517 = vmatpush.bf16.msra.mxu0 %v484
        %518 = vmatpush.bf16.msra.mxu0 %v480
        %519 = vmatpush.bf16.msra.mxu0 %v476
        %520 = vmatpush.bf16.msra.mxu0 %v472
        %521 = vmatpush.bf16.msra.mxu0 %v468
        %522 = vmatpush.bf16.msra.mxu0 %v464
        %523 = vmatpush.bf16.msra.mxu0 %v460
        %524 = vmatmul.bf16.gmra.mxu0 %v510
        %v525 = vpop.f32.mrf.mxu0
        %v526 = vadd.f32 0.0, %v525
        %v527 = vpop.f32.mrf.mxu0
        %v528 = vadd.f32 0.0, %v527
        %529 = vmatmul.bf16.gmra.mxu0 %v511
        %v530 = vpop.f32.mrf.mxu0
        %v531 = vadd.f32 0.0, %v530
        %v532 = vpop.f32.mrf.mxu0
        %v533 = vadd.f32 0.0, %v532
        %534 = vmatmul.bf16.gmra.mxu0 %v512
        %v535 = vpop.f32.mrf.mxu0
        %v536 = vadd.f32 0.0, %v535
        %v537 = vpop.f32.mrf.mxu0
        %v538 = vadd.f32 0.0, %v537
        %539 = vdwg.mxu0
        %540 = vmatpush.bf16.msra.mxu0 %v489
        %541 = vmatpush.bf16.msra.mxu0 %v485
        %542 = vmatpush.bf16.msra.mxu0 %v481
        %543 = vmatpush.bf16.msra.mxu0 %v477
        %544 = vmatpush.bf16.msra.mxu0 %v473
        %545 = vmatpush.bf16.msra.mxu0 %v469
        %546 = vmatpush.bf16.msra.mxu0 %v465
        %547 = vmatpush.bf16.msra.mxu0 %v461
        %548 = vmatmul.bf16.gmra.mxu0 %v510
        %v549 = vpop.f32.mrf.mxu0
        %v550 = vadd.f32 0.0, %v549
        %v551 = vpop.f32.mrf.mxu0
        %v552 = vadd.f32 0.0, %v551
        %553 = vmatmul.bf16.gmra.mxu0 %v511
        %v554 = vpop.f32.mrf.mxu0
        %v555 = vadd.f32 0.0, %v554
        %v556 = vpop.f32.mrf.mxu0
        %v557 = vadd.f32 0.0, %v556
        %558 = vmatmul.bf16.gmra.mxu0 %v512
        %v559 = vpop.f32.mrf.mxu0
        %v560 = vadd.f32 0.0, %v559
        %v561 = vpop.f32.mrf.mxu0
        %v562 = vadd.f32 0.0, %v561
        %563 = vdwg.mxu0
        %564 = vmatpush.bf16.msra.mxu0 %v490
        %565 = vmatpush.bf16.msra.mxu0 %v486
        %566 = vmatpush.bf16.msra.mxu0 %v482
        %567 = vmatpush.bf16.msra.mxu0 %v478
        %568 = vmatpush.bf16.msra.mxu0 %v474
        %569 = vmatpush.bf16.msra.mxu0 %v470
        %570 = vmatpush.bf16.msra.mxu0 %v466
        %571 = vmatpush.bf16.msra.mxu0 %v462
        %572 = vmatmul.bf16.gmra.mxu0 %v510
        %v573 = vpop.f32.mrf.mxu0
        %v574 = vadd.f32 0.0, %v573
        %v575 = vpop.f32.mrf.mxu0
        %v576 = vadd.f32 0.0, %v575
        %577 = vmatmul.bf16.gmra.mxu0 %v511
        %v578 = vpop.f32.mrf.mxu0
        %v579 = vadd.f32 0.0, %v578
        %v580 = vpop.f32.mrf.mxu0
        %v581 = vadd.f32 0.0, %v580
        %582 = vmatmul.bf16.gmra.mxu0 %v512
        %v583 = vpop.f32.mrf.mxu0
        %v584 = vadd.f32 0.0, %v583
        %v585 = vpop.f32.mrf.mxu0
        %v586 = vadd.f32 0.0, %v585
        %587 = vdwg.mxu0
        %588 = vmatpush.bf16.msra.mxu0 %v491
        %589 = vmatpush.bf16.msra.mxu0 %v487
        %590 = vmatpush.bf16.msra.mxu0 %v483
        %591 = vmatpush.bf16.msra.mxu0 %v479
        %592 = vmatpush.bf16.msra.mxu0 %v475
        %593 = vmatpush.bf16.msra.mxu0 %v471
        %594 = vmatpush.bf16.msra.mxu0 %v467
        %595 = vmatpush.bf16.msra.mxu0 %v463
        %596 = vmatmul.bf16.gmra.mxu0 %v510
        %v597 = vpop.f32.mrf.mxu0
        %v598 = vadd.f32 0.0, %v597
        %v599 = vpop.f32.mrf.mxu0
        %v600 = vadd.f32 0.0, %v599
        %601 = vmatmul.bf16.gmra.mxu0 %v511
        %v602 = vpop.f32.mrf.mxu0
        %v603 = vadd.f32 0.0, %v602
        %v604 = vpop.f32.mrf.mxu0
        %v605 = vadd.f32 0.0, %v604
        %606 = vmatmul.bf16.gmra.mxu0 %v512
        %v607 = vpop.f32.mrf.mxu0
        %v608 = vadd.f32 0.0, %v607
        %v609 = vpop.f32.mrf.mxu0
        %v610 = vadd.f32 0.0, %v609
        %611 = vdwg.mxu0
        %v612 = vadd.f32 %v526, %v531
        %v613 = vadd.f32 %v550, %v555
        %v614 = vadd.f32 %v574, %v579
        %v615 = vadd.f32 %v598, %v603
        %v616 = vadd.f32 %v528, %v533
        %v617 = vadd.f32 %v552, %v557
        %v618 = vadd.f32 %v576, %v581
        %v619 = vadd.f32 %v600, %v605
        %v620 = vadd.f32 %v612, %v536
        %v621 = vadd.f32 %v613, %v560
        %v622 = vadd.f32 %v614, %v584
        %v623 = vadd.f32 %v615, %v608
        %v624 = vadd.f32 %v616, %v538
        %v625 = vadd.f32 %v617, %v562
        %v626 = vadd.f32 %v618, %v586
        %v627 = vadd.f32 %v619, %v610
        %v628 = vperm.slane %v251, 0
        %v629 = vmul.f32 %v620, %v628
        %v630 = vperm.slane %v251, 1
        %v631 = vmul.f32 %v624, %v630
        %v632 = vadd.f32 %v629, %v631
        %v633 = vsub.f32 %v251, 1.0
        %v634 = vmul.f32 %v621, %v628
        %v635 = vperm.slane %v633, 1
        %v636 = vmul.f32 %v625, %v635
        %v637 = vadd.f32 %v634, %v636
        %v638 = vperm.slane %v633, 0
        %v639 = vmul.f32 %v622, %v638
        %v640 = vmul.f32 %v626, %v630
        %v641 = vadd.f32 %v639, %v640
        %v642 = vmul.f32 %v623, %v638
        %v643 = vmul.f32 %v627, %v635
        %v644 = vadd.f32 %v642, %v643
        %v645 = vmul.f32 %v251, 2.0
        %v646 = vsub.f32 3.0, %v645
        %v647 = vmul.f32 %v646, %v251
        %v648 = vmul.f32 %v647, %v251
        %v649 = vsub.f32 %v641, %v632
        %v650 = vperm.slane %v648, 0
        %v651 = vmul.f32 %v650, %v649
        %v652 = vadd.f32 %v632, %v651
        %v653 = vsub.f32 %v644, %v637
        %v654 = vmul.f32 %v650, %v653
        %v655 = vadd.f32 %v637, %v654
        %v656 = vsub.f32 %v655, %v652
        %v657 = vperm.slane %v648, 1
        %v658 = vmul.f32 %v657, %v656
        %v659 = vadd.f32 %v652, %v658
        %v660 = vadd.f32 %v659, 0.0
        %v661 = vmul.f32 %v221, 8.0
        %v662 = vmul.f32 %v661, 0.125
        %vm663 = vcmp.lt.f32.partialorder %v662, 0.0
        %v664 = vceil.f32 %v662
        %v665 = vfloor.f32 %v662
        %v666 = vsel %vm663, %v664, %v665
        %v667 = vmul.f32 %v666, 8.0
        %v668 = vsub.f32 %v661, %v667
        %vm669 = vcmp.lt.f32.partialorder %v668, 0.0
        %v670 = vceil.f32 %v668
        %v671 = vfloor.f32 %v668
        %v672 = vsel %vm669, %v670, %v671
        %v673 = vsub.f32 %v668, %v672
        %v674 = vcvt.f32.s32.to.zero.pseudo %v671
        %v675 = vadd.s32 %v674, 1
        %vm676 = vcmp.lt.s32.totalorder %v675, 8
        %v677 = vsel %vm676, %v675, 8
        %v678 = vmul.u32 %v674, 9
        %v679 = vrot.slane %v674, 1
        %v680 = vadd.s32 %v678, %v679
        %v681 = vrot.slane %v677, 1
        %v682 = vadd.s32 %v678, %v681
        %v683 = vmul.u32 %v677, 9
        %v684 = vadd.s32 %v683, %v679
        %v685 = vadd.s32 %v683, %v681
        %v686 = vperm.slane %v680, 0
        %v687 = vperm.slane %v682, 0
        %v688 = vperm.slane %v684, 0
        %v689 = vperm.slane %v685, 0
        %vm690 = vcmp.eq.s32.totalorder %v223, %v686
        %vm691 = vcmp.eq.s32.totalorder %v223, %v687
        %vm692 = vcmp.eq.s32.totalorder %v223, %v688
        %vm693 = vcmp.eq.s32.totalorder %v223, %v689
        %vm694 = vcmp.eq.s32.totalorder %v224, %v686
        %vm695 = vcmp.eq.s32.totalorder %v224, %v687
        %vm696 = vcmp.eq.s32.totalorder %v224, %v688
        %vm697 = vcmp.eq.s32.totalorder %v224, %v689
        %vm698 = vcmp.eq.s32.totalorder %v225, %v686
        %vm699 = vcmp.eq.s32.totalorder %v225, %v687
        %vm700 = vcmp.eq.s32.totalorder %v225, %v688
        %vm701 = vcmp.eq.s32.totalorder %v225, %v689
        %vm702 = vcmp.eq.s32.totalorder %v226, %v686
        %vm703 = vcmp.eq.s32.totalorder %v226, %v687
        %vm704 = vcmp.eq.s32.totalorder %v226, %v688
        %vm705 = vcmp.eq.s32.totalorder %v226, %v689
        %vm706 = vcmp.eq.s32.totalorder %v227, %v686
        %vm707 = vcmp.eq.s32.totalorder %v227, %v687
        %vm708 = vcmp.eq.s32.totalorder %v227, %v688
        %vm709 = vcmp.eq.s32.totalorder %v227, %v689
        %vm710 = vcmp.eq.s32.totalorder %v228, %v686
        %vm711 = vcmp.eq.s32.totalorder %v228, %v687
        %vm712 = vcmp.eq.s32.totalorder %v228, %v688
        %vm713 = vcmp.eq.s32.totalorder %v228, %v689
        %vm714 = vcmp.eq.s32.totalorder %v229, %v686
        %vm715 = vcmp.eq.s32.totalorder %v229, %v687
        %vm716 = vcmp.eq.s32.totalorder %v229, %v688
        %vm717 = vcmp.eq.s32.totalorder %v229, %v689
        %vm718 = vcmp.eq.s32.totalorder %v230, %v686
        %vm719 = vcmp.eq.s32.totalorder %v230, %v687
        %vm720 = vcmp.eq.s32.totalorder %v230, %v688
        %vm721 = vcmp.eq.s32.totalorder %v230, %v689
        %vm722 = vcmp.eq.s32.totalorder %v231, %v686
        %vm723 = vcmp.eq.s32.totalorder %v231, %v687
        %vm724 = vcmp.eq.s32.totalorder %v231, %v688
        %vm725 = vcmp.eq.s32.totalorder %v231, %v689
        %vm726 = vcmp.eq.s32.totalorder %v232, %v686
        %vm727 = vcmp.eq.s32.totalorder %v232, %v687
        %vm728 = vcmp.eq.s32.totalorder %v232, %v688
        %vm729 = vcmp.eq.s32.totalorder %v232, %v689
        %vm730 = vcmp.eq.s32.totalorder %v233, %v686
        %vm731 = vcmp.eq.s32.totalorder %v233, %v687
        %vm732 = vcmp.eq.s32.totalorder %v233, %v688
        %vm733 = vcmp.eq.s32.totalorder %v233, %v689
        %vm734 = vcmp.eq.s32.totalorder %v234, %v686
        %vm735 = vcmp.eq.s32.totalorder %v234, %v687
        %vm736 = vcmp.eq.s32.totalorder %v234, %v688
        %vm737 = vcmp.eq.s32.totalorder %v234, %v689
        %vm738 = vcmp.eq.s32.totalorder %v235, %v686
        %vm739 = vcmp.eq.s32.totalorder %v235, %v687
        %vm740 = vcmp.eq.s32.totalorder %v235, %v688
        %vm741 = vcmp.eq.s32.totalorder %v235, %v689
        %vm742 = vcmp.eq.s32.totalorder %v236, %v686
        %vm743 = vcmp.eq.s32.totalorder %v236, %v687
        %vm744 = vcmp.eq.s32.totalorder %v236, %v688
        %vm745 = vcmp.eq.s32.totalorder %v236, %v689
        %vm746 = vcmp.eq.s32.totalorder %v237, %v686
        %vm747 = vcmp.eq.s32.totalorder %v237, %v687
        %vm748 = vcmp.eq.s32.totalorder %v237, %v688
        %vm749 = vcmp.eq.s32.totalorder %v237, %v689
        %vm750 = vcmp.eq.s32.totalorder %v238, %v686
        %vm751 = vcmp.eq.s32.totalorder %v238, %v687
        %vm752 = vcmp.eq.s32.totalorder %v238, %v688
        %vm753 = vcmp.eq.s32.totalorder %v238, %v689
        %v754 = vsel %vm690, 1, 0
        %v755 = vsel %vm691, 1, 0
        %v756 = vsel %vm692, 1, 0
        %v757 = vsel %vm693, 1, 0
        %v758 = vsel %vm694, 1, 0
        %v759 = vsel %vm695, 1, 0
        %v760 = vsel %vm696, 1, 0
        %v761 = vsel %vm697, 1, 0
        %v762 = vsel %vm698, 1, 0
        %v763 = vsel %vm699, 1, 0
        %v764 = vsel %vm700, 1, 0
        %v765 = vsel %vm701, 1, 0
        %v766 = vsel %vm702, 1, 0
        %v767 = vsel %vm703, 1, 0
        %v768 = vsel %vm704, 1, 0
        %v769 = vsel %vm705, 1, 0
        %v770 = vsel %vm706, 1, 0
        %v771 = vsel %vm707, 1, 0
        %v772 = vsel %vm708, 1, 0
        %v773 = vsel %vm709, 1, 0
        %v774 = vsel %vm710, 1, 0
        %v775 = vsel %vm711, 1, 0
        %v776 = vsel %vm712, 1, 0
        %v777 = vsel %vm713, 1, 0
        %v778 = vsel %vm714, 1, 0
        %v779 = vsel %vm715, 1, 0
        %v780 = vsel %vm716, 1, 0
        %v781 = vsel %vm717, 1, 0
        %v782 = vsel %vm718, 1, 0
        %v783 = vsel %vm719, 1, 0
        %v784 = vsel %vm720, 1, 0
        %v785 = vsel %vm721, 1, 0
        %v786 = vsel %vm722, 1, 0
        %v787 = vsel %vm723, 1, 0
        %v788 = vsel %vm724, 1, 0
        %v789 = vsel %vm725, 1, 0
        %v790 = vsel %vm726, 1, 0
        %v791 = vsel %vm727, 1, 0
        %v792 = vsel %vm728, 1, 0
        %v793 = vsel %vm729, 1, 0
        %v794 = vsel %vm730, 1, 0
        %v795 = vsel %vm731, 1, 0
        %v796 = vsel %vm732, 1, 0
        %v797 = vsel %vm733, 1, 0
        %v798 = vsel %vm734, 1, 0
        %v799 = vsel %vm735, 1, 0
        %v800 = vsel %vm736, 1, 0
        %v801 = vsel %vm737, 1, 0
        %v802 = vsel %vm738, 1, 0
        %v803 = vsel %vm739, 1, 0
        %v804 = vsel %vm740, 1, 0
        %v805 = vsel %vm741, 1, 0
        %v806 = vsel %vm742, 1, 0
        %v807 = vsel %vm743, 1, 0
        %v808 = vsel %vm744, 1, 0
        %v809 = vsel %vm745, 1, 0
        %v810 = vsel %vm746, 1, 0
        %v811 = vsel %vm747, 1, 0
        %v812 = vsel %vm748, 1, 0
        %v813 = vsel %vm749, 1, 0
        %v814 = vsel %vm750, 1, 0
        %v815 = vsel %vm751, 1, 0
        %v816 = vsel %vm752, 1, 0
        %v817 = vsel %vm753, 1, 0
        %v818 = vcvt.s32.f32 %v754
        %v819 = vcvt.s32.f32 %v755
        %v820 = vcvt.s32.f32 %v756
        %v821 = vcvt.s32.f32 %v757
        %v822 = vcvt.s32.f32 %v758
        %v823 = vcvt.s32.f32 %v759
        %v824 = vcvt.s32.f32 %v760
        %v825 = vcvt.s32.f32 %v761
        %v826 = vcvt.s32.f32 %v762
        %v827 = vcvt.s32.f32 %v763
        %v828 = vcvt.s32.f32 %v764
        %v829 = vcvt.s32.f32 %v765
        %v830 = vcvt.s32.f32 %v766
        %v831 = vcvt.s32.f32 %v767
        %v832 = vcvt.s32.f32 %v768
        %v833 = vcvt.s32.f32 %v769
        %v834 = vcvt.s32.f32 %v770
        %v835 = vcvt.s32.f32 %v771
        %v836 = vcvt.s32.f32 %v772
        %v837 = vcvt.s32.f32 %v773
        %v838 = vcvt.s32.f32 %v774
        %v839 = vcvt.s32.f32 %v775
        %v840 = vcvt.s32.f32 %v776
        %v841 = vcvt.s32.f32 %v777
        %v842 = vcvt.s32.f32 %v778
        %v843 = vcvt.s32.f32 %v779
        %v844 = vcvt.s32.f32 %v780
        %v845 = vcvt.s32.f32 %v781
        %v846 = vcvt.s32.f32 %v782
        %v847 = vcvt.s32.f32 %v783
        %v848 = vcvt.s32.f32 %v784
        %v849 = vcvt.s32.f32 %v785
        %v850 = vcvt.s32.f32 %v786
        %v851 = vcvt.s32.f32 %v787
        %v852 = vcvt.s32.f32 %v788
        %v853 = vcvt.s32.f32 %v789
        %v854 = vcvt.s32.f32 %v790
        %v855 = vcvt.s32.f32 %v791
        %v856 = vcvt.s32.f32 %v792
        %v857 = vcvt.s32.f32 %v793
        %v858 = vcvt.s32.f32 %v794
        %v859 = vcvt.s32.f32 %v795
        %v860 = vcvt.s32.f32 %v796
        %v861 = vcvt.s32.f32 %v797
        %v862 = vcvt.s32.f32 %v798
        %v863 = vcvt.s32.f32 %v799
        %v864 = vcvt.s32.f32 %v800
        %v865 = vcvt.s32.f32 %v801
        %v866 = vcvt.s32.f32 %v802
        %v867 = vcvt.s32.f32 %v803
        %v868 = vcvt.s32.f32 %v804
        %v869 = vcvt.s32.f32 %v805
        %v870 = vcvt.s32.f32 %v806
        %v871 = vcvt.s32.f32 %v807
        %v872 = vcvt.s32.f32 %v808
        %v873 = vcvt.s32.f32 %v809
        %v874 = vcvt.s32.f32 %v810
        %v875 = vcvt.s32.f32 %v811
        %v876 = vcvt.s32.f32 %v812
        %v877 = vcvt.s32.f32 %v813
        %v878 = vcvt.s32.f32 %v814
        %v879 = vcvt.s32.f32 %v815
        %v880 = vcvt.s32.f32 %v816
        %v881 = vcvt.s32.f32 %v817
        %v882 = vpack.c.bf16 %v822, %v818
        %v883 = vpack.c.bf16 %v823, %v819
        %v884 = vpack.c.bf16 %v824, %v820
        %v885 = vpack.c.bf16 %v825, %v821
        %v886 = vpack.c.bf16 %v830, %v826
        %v887 = vpack.c.bf16 %v831, %v827
        %v888 = vpack.c.bf16 %v832, %v828
        %v889 = vpack.c.bf16 %v833, %v829
        %v890 = vpack.c.bf16 %v838, %v834
        %v891 = vpack.c.bf16 %v839, %v835
        %v892 = vpack.c.bf16 %v840, %v836
        %v893 = vpack.c.bf16 %v841, %v837
        %v894 = vpack.c.bf16 %v846, %v842
        %v895 = vpack.c.bf16 %v847, %v843
        %v896 = vpack.c.bf16 %v848, %v844
        %v897 = vpack.c.bf16 %v849, %v845
        %v898 = vpack.c.bf16 %v854, %v850
        %v899 = vpack.c.bf16 %v855, %v851
        %v900 = vpack.c.bf16 %v856, %v852
        %v901 = vpack.c.bf16 %v857, %v853
        %v902 = vpack.c.bf16 %v862, %v858
        %v903 = vpack.c.bf16 %v863, %v859
        %v904 = vpack.c.bf16 %v864, %v860
        %v905 = vpack.c.bf16 %v865, %v861
        %v906 = vpack.c.bf16 %v870, %v866
        %v907 = vpack.c.bf16 %v871, %v867
        %v908 = vpack.c.bf16 %v872, %v868
        %v909 = vpack.c.bf16 %v873, %v869
        %v910 = vpack.c.bf16 %v878, %v874
        %v911 = vpack.c.bf16 %v879, %v875
        %v912 = vpack.c.bf16 %v880, %v876
        %v913 = vpack.c.bf16 %v881, %v877
        %v914 = vld [vmem:[#allocation7] sm:$0xf]
        %v915 = vld [vmem:[#allocation7 + $0x4] sm:$0xf]
        %v916 = vld [vmem:[#allocation7 + $0x8] sm:$0xf]
        %v917 = vld [vmem:[#allocation7 + $0xc] sm:$0xf]
        %v918 = vld [vmem:[#allocation7 + $0x10] sm:$0xf]
        %v919 = vld [vmem:[#allocation7 + $0x14] sm:$0xf]
        %v926 = vunpack.c.l.b16 %v914
        %v927 = vunpack.c.l.b16 %v915
        %v928 = vunpack.c.l.b16 %v916
        %v929 = vunpack.c.l.b16 %v917
        %v930 = vunpack.c.l.b16 %v918
        %v931 = vunpack.c.l.b16 %v919
        %v932 = vpack.c.b16 %v927, %v926
        %v933 = vpack.c.b16 %v929, %v928
        %v934 = vpack.c.b16 %v931, %v930
        %938 = vmatpush.bf16.msra.mxu0 %v910
        %939 = vmatpush.bf16.msra.mxu0 %v906
        %940 = vmatpush.bf16.msra.mxu0 %v902
        %941 = vmatpush.bf16.msra.mxu0 %v898
        %942 = vmatpush.bf16.msra.mxu0 %v894
        %943 = vmatpush.bf16.msra.mxu0 %v890
        %944 = vmatpush.bf16.msra.mxu0 %v886
        %945 = vmatpush.bf16.msra.mxu0 %v882
        %946 = vmatmul.bf16.gmra.mxu0 %v932
        %v947 = vpop.f32.mrf.mxu0
        %v948 = vadd.f32 0.0, %v947
        %v949 = vpop.f32.mrf.mxu0
        %v950 = vadd.f32 0.0, %v949
        %951 = vmatmul.bf16.gmra.mxu0 %v933
        %v952 = vpop.f32.mrf.mxu0
        %v953 = vadd.f32 0.0, %v952
        %v954 = vpop.f32.mrf.mxu0
        %v955 = vadd.f32 0.0, %v954
        %956 = vmatmul.bf16.gmra.mxu0 %v934
        %v957 = vpop.f32.mrf.mxu0
        %v958 = vadd.f32 0.0, %v957
        %v959 = vpop.f32.mrf.mxu0
        %v960 = vadd.f32 0.0, %v959
        %961 = vdwg.mxu0
        %962 = vmatpush.bf16.msra.mxu0 %v911
        %963 = vmatpush.bf16.msra.mxu0 %v907
        %964 = vmatpush.bf16.msra.mxu0 %v903
        %965 = vmatpush.bf16.msra.mxu0 %v899
        %966 = vmatpush.bf16.msra.mxu0 %v895
        %967 = vmatpush.bf16.msra.mxu0 %v891
        %968 = vmatpush.bf16.msra.mxu0 %v887
        %969 = vmatpush.bf16.msra.mxu0 %v883
        %970 = vmatmul.bf16.gmra.mxu0 %v932
        %v971 = vpop.f32.mrf.mxu0
        %v972 = vadd.f32 0.0, %v971
        %v973 = vpop.f32.mrf.mxu0
        %v974 = vadd.f32 0.0, %v973
        %975 = vmatmul.bf16.gmra.mxu0 %v933
        %v976 = vpop.f32.mrf.mxu0
        %v977 = vadd.f32 0.0, %v976
        %v978 = vpop.f32.mrf.mxu0
        %v979 = vadd.f32 0.0, %v978
        %980 = vmatmul.bf16.gmra.mxu0 %v934
        %v981 = vpop.f32.mrf.mxu0
        %v982 = vadd.f32 0.0, %v981
        %v983 = vpop.f32.mrf.mxu0
        %v984 = vadd.f32 0.0, %v983
        %985 = vdwg.mxu0
        %986 = vmatpush.bf16.msra.mxu0 %v912
        %987 = vmatpush.bf16.msra.mxu0 %v908
        %988 = vmatpush.bf16.msra.mxu0 %v904
        %989 = vmatpush.bf16.msra.mxu0 %v900
        %990 = vmatpush.bf16.msra.mxu0 %v896
        %991 = vmatpush.bf16.msra.mxu0 %v892
        %992 = vmatpush.bf16.msra.mxu0 %v888
        %993 = vmatpush.bf16.msra.mxu0 %v884
        %994 = vmatmul.bf16.gmra.mxu0 %v932
        %v995 = vpop.f32.mrf.mxu0
        %v996 = vadd.f32 0.0, %v995
        %v997 = vpop.f32.mrf.mxu0
        %v998 = vadd.f32 0.0, %v997
        %999 = vmatmul.bf16.gmra.mxu0 %v933
        %v1000 = vpop.f32.mrf.mxu0
        %v1001 = vadd.f32 0.0, %v1000
        %v1002 = vpop.f32.mrf.mxu0
        %v1003 = vadd.f32 0.0, %v1002
        %1004 = vmatmul.bf16.gmra.mxu0 %v934
        %v1005 = vpop.f32.mrf.mxu0
        %v1006 = vadd.f32 0.0, %v1005
        %v1007 = vpop.f32.mrf.mxu0
        %v1008 = vadd.f32 0.0, %v1007
        %1009 = vdwg.mxu0
        %1010 = vmatpush.bf16.msra.mxu0 %v913
        %1011 = vmatpush.bf16.msra.mxu0 %v909
        %1012 = vmatpush.bf16.msra.mxu0 %v905
        %1013 = vmatpush.bf16.msra.mxu0 %v901
        %1014 = vmatpush.bf16.msra.mxu0 %v897
        %1015 = vmatpush.bf16.msra.mxu0 %v893
        %1016 = vmatpush.bf16.msra.mxu0 %v889
        %1017 = vmatpush.bf16.msra.mxu0 %v885
        %1018 = vmatmul.bf16.gmra.mxu0 %v932
        %v1019 = vpop.f32.mrf.mxu0
        %v1020 = vadd.f32 0.0, %v1019
        %v1021 = vpop.f32.mrf.mxu0
        %v1022 = vadd.f32 0.0, %v1021
        %1023 = vmatmul.bf16.gmra.mxu0 %v933
        %v1024 = vpop.f32.mrf.mxu0
        %v1025 = vadd.f32 0.0, %v1024
        %v1026 = vpop.f32.mrf.mxu0
        %v1027 = vadd.f32 0.0, %v1026
        %1028 = vmatmul.bf16.gmra.mxu0 %v934
        %v1029 = vpop.f32.mrf.mxu0
        %v1030 = vadd.f32 0.0, %v1029
        %v1031 = vpop.f32.mrf.mxu0
        %v1032 = vadd.f32 0.0, %v1031
        %1033 = vdwg.mxu0
        %v1034 = vadd.f32 %v948, %v953
        %v1035 = vadd.f32 %v972, %v977
        %v1036 = vadd.f32 %v996, %v1001
        %v1037 = vadd.f32 %v1020, %v1025
        %v1038 = vadd.f32 %v950, %v955
        %v1039 = vadd.f32 %v974, %v979
        %v1040 = vadd.f32 %v998, %v1003
        %v1041 = vadd.f32 %v1022, %v1027
        %v1042 = vadd.f32 %v1034, %v958
        %v1043 = vadd.f32 %v1035, %v982
        %v1044 = vadd.f32 %v1036, %v1006
        %v1045 = vadd.f32 %v1037, %v1030
        %v1046 = vadd.f32 %v1038, %v960
        %v1047 = vadd.f32 %v1039, %v984
        %v1048 = vadd.f32 %v1040, %v1008
        %v1049 = vadd.f32 %v1041, %v1032
        %v1050 = vperm.slane %v673, 0
        %v1051 = vmul.f32 %v1042, %v1050
        %v1052 = vperm.slane %v673, 1
        %v1053 = vmul.f32 %v1046, %v1052
        %v1054 = vadd.f32 %v1051, %v1053
        %v1055 = vsub.f32 %v673, 1.0
        %v1056 = vmul.f32 %v1043, %v1050
        %v1057 = vperm.slane %v1055, 1
        %v1058 = vmul.f32 %v1047, %v1057
        %v1059 = vadd.f32 %v1056, %v1058
        %v1060 = vperm.slane %v1055, 0
        %v1061 = vmul.f32 %v1044, %v1060
        %v1062 = vmul.f32 %v1048, %v1052
        %v1063 = vadd.f32 %v1061, %v1062
        %v1064 = vmul.f32 %v1045, %v1060
        %v1065 = vmul.f32 %v1049, %v1057
        %v1066 = vadd.f32 %v1064, %v1065
        %v1067 = vmul.f32 %v673, 2.0
        %v1068 = vsub.f32 3.0, %v1067
        %v1069 = vmul.f32 %v1068, %v673
        %v1070 = vmul.f32 %v1069, %v673
        %v1071 = vsub.f32 %v1063, %v1054
        %v1072 = vperm.slane %v1070, 0
        %v1073 = vmul.f32 %v1072, %v1071
        %v1074 = vadd.f32 %v1054, %v1073
        %v1075 = vsub.f32 %v1066, %v1059
        %v1076 = vmul.f32 %v1072, %v1075
        %v1077 = vadd.f32 %v1059, %v1076
        %v1078 = vsub.f32 %v1077, %v1074
        %v1079 = vperm.slane %v1070, 1
        %v1080 = vmul.f32 %v1079, %v1078
        %v1081 = vadd.f32 %v1074, %v1080
        %v1082 = vadd.f32 %v660, %v1081
        %1083 = vst [vmem:[%s220] sm:$0xff] %v1082
        %s1084 = sand.u32 %s97, 1
        %s1085 = scalar_lea.sflag [#allocation4], %s1084
        %s1086 = sand.u32 %s97, 1
        %s1087 = smul.addr %s1086, 8
        %s1088 = scalar_lea.vmem [#allocation8], %s1087
        // Predicated region
        $region45: #{tpu_custom_call.1} parent=31 // pred_check
          %p1089 = pneg %p107
        $region46: #{tpu_custom_call.1} parent=31 // pred_check_branch
          %1091 = sbr.rel (%p1089) target = $region48
        $region47: #{tpu_custom_call.1} parent=31 // pred_region
          %1093 = vsyncadd %s1085, 0
          %s1094 = smul.addr %s21, 8
          %s1095 = scalar_lea.hbm %s3, %s1094
          %s1097 = sshll.u32 %s1088, 4
          %s1098 = int_to_ptr.vmem [resolvable:$true] %s1097
          %s1099 = sshll.u32 %s1095, 4
          %s1100 = int_to_ptr.hbm [resolvable:$true] %s1099
          %1102 = dma.vmem_to_hbm [thread:$0]  %s1098, 128, %s1100, %s1085
        $region48: #{tpu_custom_call.1} parent=31 // pred_fallthru
          _
      $region32: #{tpu_custom_call.1} parent=5 // pred_fallthru
        _
      %p1103 = scmp.le.s32.totalorder 2, %s16
      // Predicated region
      $region49: #{tpu_custom_call.1} parent=5 // pred_check
        %p1104 = pneg %p1103
      $region50: #{tpu_custom_call.1} parent=5 // pred_check_branch
        %1106 = sbr.rel (%p1104) target = $region52
      $region51: #{tpu_custom_call.1} parent=5 // pred_region
        %s1107 = ssub.s32 %s16, 2
        // Predicated region
        $region53: #{tpu_custom_call.1} parent=51 // pred_check
          %p1108 = pneg %p113
        $region54: #{tpu_custom_call.1} parent=51 // pred_check_branch
          %1110 = sbr.rel (%p1108) target = $region56
        $region55: #{tpu_custom_call.1} parent=51 // pred_region
          %s1111 = sand.u32 %s98, 1
          %s1112 = scalar_lea.sflag [#allocation4], %s1111
          %s1113 = sand.u32 %s98, 1
          %s1114 = smul.addr %s1113, 8
          %s1115 = scalar_lea.vmem [#allocation8], %s1114
          %1117 = dma.done %s1112, 128
        $region56: #{tpu_custom_call.1} parent=51 // pred_fallthru
          _
      $region52: #{tpu_custom_call.1} parent=5 // pred_fallthru
        _
    $region6: #{tpu_custom_call.1} parent=1 // loop_footer
      %s20 = sadd.s32 1, %s16
    $region7: #{tpu_custom_call.1} parent=1 // loop_footer_branch
      %15 = sbr.rel target = $region3
    $region8: #{tpu_custom_call.1} parent=1 // loop_exit
      _
    %1118 = vsyncpa [#allocation3], 1
    %s1119 = scalar_lea.sflag [#allocation3], 1
    %1120 = vsyncpa %s1119, 1
    %1121 = vsyncpa [#allocation6], 1
    %1122 = vsyncpa [#allocation4], 1
    %s1123 = scalar_lea.sflag [#allocation4], 1
    %1124 = vsyncpa %s1123, 1

</llo_original>
